<compile_context>
chip_gen: v6e
topology: v6e:2x2x1
jax: 0.10.0
libtpu: 0.0.40
codegen_flags: <defaults>
</compile_context>

<pallas_src>
import jax
import jax.numpy as jnp
from jax.experimental import pallas as pl
from jax.experimental.pallas import tpu as pltpu


K = 784        # 28*28, passed unpadded (full-dim lane axis; Mosaic pads internally)
H1 = 128       # already lane-aligned
H2_PAD = 128   # 64  -> 128 (zero-padded weight columns)
N_PAD = 128    # 10  -> 128 (lane-dense output block, sliced in the wrapper)


def mlp_kernel(x_ref, w1_ref, b1_ref, w2_ref, b2_ref, w3_ref, b3_ref, o_ref):
    cdt = w1_ref.dtype  # compute dtype for MXU operands (f32 or bf16)

    # fc1 + relu   (MXU accumulates in f32; bias add + ReLU in f32)
    h = jnp.dot(x_ref[...], w1_ref[...], preferred_element_type=jnp.float32)
    h = jnp.maximum(h + b1_ref[...], 0.0).astype(cdt)
    # fc2 + relu   (columns 64..127 of w2/b2 are zero-padded -> stay exactly 0)
    h = jnp.dot(h, w2_ref[...], preferred_element_type=jnp.float32)
    h = jnp.maximum(h + b2_ref[...], 0.0).astype(cdt)
    # fc3 (no activation); lane-dense 128-wide unmasked store
    o_ref[...] = (
        jnp.dot(h, w3_ref[...], preferred_element_type=jnp.float32) + b3_ref[...]
    ).astype(o_ref.dtype)


def _round_up(n, m):
    return ((n + m - 1) // m) * m


def _pad_to(a, shape):
    return jnp.pad(a, [(0, s - d) for d, s in zip(a.shape, shape)])


def net_forward(x, params, *, tb=None, compute_dtype=jnp.float32):
    """x: (B, 1, 28, 28) or (B, 784) float32. Returns (B, 10) float32.

    tb: batch tile (rows per grid step). Defaults to min(512, B) rounded to 8.
        At tb=512/f32 the per-step VMEM footprint is ~4 MiB double-buffered,
        comfortably inside the default scoped VMEM limit on v5e/v6e/v7x.
    compute_dtype: jnp.float32 or jnp.bfloat16 (bf16 recommended on v6e/v7x —
        the kernel is HBM-bandwidth bound on streaming x).
    """
    w1, b1, w2, b2, w3, b3 = params
    x2d = x.reshape(-1, K)
    B = x2d.shape[0]

    if tb is None:
        tb = min(512, _round_up(B, 8))
    tb = max(8, _round_up(tb, 8))
    Bp = pl.cdiv(B, tb) * tb  # pad batch up to a whole number of tiles

    # Only the batch dim is padded, and only when needed (common case: no copy).
    # TODO(synk): if the real input is uint8 pixels, pass it raw and cast inside the
    # kernel instead — quarters the dominant HBM read stream.
    xp = x2d.astype(compute_dtype)
    if Bp != B:
        xp = jnp.pad(xp, ((0, Bp - B), (0, 0)))

    # Weights: tiny, padded once to lane-aligned shapes; zeros don't change the math.
    w1p = w1.astype(compute_dtype)                              # (784, 128) unpadded
    w2p = _pad_to(w2, (H1, H2_PAD)).astype(compute_dtype)       # (128, 128)
    w3p = _pad_to(w3, (H2_PAD, N_PAD)).astype(compute_dtype)    # (128, 128)
    b1p = b1.astype(jnp.float32)                                # (1, 128)
    b2p = _pad_to(b2, (1, H2_PAD)).astype(jnp.float32)
    b3p = _pad_to(b3, (1, N_PAD)).astype(jnp.float32)

    grid = (Bp // tb,)
    # Weights/biases (~0.5 MiB total) stay fully resident in VMEM every grid step;
    # only the batch dimension of x / out is tiled.
    in_specs = [
        pl.BlockSpec((tb, K), lambda i: (i, 0)),              # x tile (784 = full dim)
        pl.BlockSpec((K, H1), lambda i: (0, 0)),              # W1
        pl.BlockSpec((1, H1), lambda i: (0, 0)),              # b1
        pl.BlockSpec((H1, H2_PAD), lambda i: (0, 0)),         # W2 (padded)
        pl.BlockSpec((1, H2_PAD), lambda i: (0, 0)),          # b2
        pl.BlockSpec((H2_PAD, N_PAD), lambda i: (0, 0)),      # W3 (padded)
        pl.BlockSpec((1, N_PAD), lambda i: (0, 0)),           # b3
    ]
    out_spec = pl.BlockSpec((tb, N_PAD), lambda i: (i, 0))    # lane-dense output

    out = pl.pallas_call(
        mlp_kernel,
        out_shape=jax.ShapeDtypeStruct((Bp, N_PAD), jnp.float32),
        grid_spec=pltpu.PrefetchScalarGridSpec(
            num_scalar_prefetch=0,
            grid=grid,
            in_specs=in_specs,
            out_specs=out_spec,
        ),
        compiler_params=pltpu.CompilerParams(
            dimension_semantics=("parallel",),  # batch axis shards across megacores
        ),
    )(xp, w1p, b1p, w2p, b2p, w3p, b3p)

    return out[:B, :10]


def init_params(key):
    """Deterministic init mimicking PyTorch nn.Linear default (U[-1/sqrt(fan_in), +])."""
    def linear(key, fan_in, fan_out):
        kw, kb = jax.random.split(key)
        bound = 1.0 / jnp.sqrt(float(fan_in))
        # stored as (in, out) so the kernel computes x @ W directly
        w = jax.random.uniform(kw, (fan_in, fan_out), jnp.float32, -bound, bound)
        b = jax.random.uniform(kb, (1, fan_out), jnp.float32, -bound, bound)
        return w, b

    k1, k2, k3 = jax.random.split(key, 3)
    w1, b1 = linear(k1, 28 * 28, 128)
    w2, b2 = linear(k2, 128, 64)
    w3, b3 = linear(k3, 64, 10)
    return (w1, b1, w2, b2, w3, b3)


def reference_forward(x, params):
    w1, b1, w2, b2, w3, b3 = params
    h = x.reshape(-1, 784).astype(jnp.float32)
    h = jnp.maximum(h @ w1 + b1, 0.0)
    h = jnp.maximum(h @ w2 + b2, 0.0)
    return h @ w3 + b3


if __name__ == "__main__":
    key = jax.random.PRNGKey(0)
    kx, kp = jax.random.split(key)

    B = 256
    x = jax.random.normal(kx, (B, 1, 28, 28), dtype=jnp.float32)  # NCHW like PyTorch
    params = init_params(kp)
    ref = reference_forward(x, params)

    # f32 path; tb=128 -> grid=(2,) so the parallel batch axis can use both cores.
    out = jax.block_until_ready(net_forward(x, params, tb=128))
    assert out.shape == (B, 10)
    assert jnp.allclose(out, ref, atol=1e-4, rtol=1e-4)

    # bf16 streaming path (v6e / v7x recommendation); f32 accumulation, looser check.
    out_bf16 = jax.block_until_ready(
        net_forward(x, params, tb=128, compute_dtype=jnp.bfloat16))
    assert out_bf16.shape == (B, 10)
    assert jnp.allclose(out_bf16, ref, atol=1e-1, rtol=1e-1)

    # Odd batch size exercises the batch-padded tail path.
    out_odd = jax.block_until_ready(net_forward(x[:37], params, tb=128))
    assert out_odd.shape == (37, 10)
    assert jnp.allclose(out_odd, ref[:37], atol=1e-4, rtol=1e-4)

    # Default tile selection path (tb = min(512, B)).
    out_def = jax.block_until_ready(net_forward(x, params))
    assert jnp.allclose(out_def, ref, atol=1e-4, rtol=1e-4)

    print("KERNEL_OK")
</pallas_src>

<mosaic_0001>
module attributes {stable_mosaic.version = 11 : i64} {
  func.func @mlp_kernel(%arg0: i32, %arg1: memref<128x784xf32, #tpu.memory_space<vmem>>, %arg2: memref<784x128xf32, #tpu.memory_space<vmem>>, %arg3: memref<1x128xf32, #tpu.memory_space<vmem>>, %arg4: memref<128x128xf32, #tpu.memory_space<vmem>>, %arg5: memref<1x128xf32, #tpu.memory_space<vmem>>, %arg6: memref<128x128xf32, #tpu.memory_space<vmem>>, %arg7: memref<1x128xf32, #tpu.memory_space<vmem>>, %arg8: memref<128x128xf32, #tpu.memory_space<vmem>>) attributes {dimension_semantics = [#tpu.dimension_semantics<parallel>], iteration_bounds = array<i64: 2>, scalar_prefetch = 0 : i64, scratch_operands = 0 : i64, tpu.core_type = #tpu.core_type<tc>, window_params = [{transform_indices = @transform_0, window_bounds = array<i64: 128, 784>}, {pipeline_mode = #tpu.pipeline_mode<synchronous>, transform_indices = @transform_1, window_bounds = array<i64: 784, 128>}, {pipeline_mode = #tpu.pipeline_mode<synchronous>, transform_indices = @transform_2, window_bounds = array<i64: 1, 128>}, {pipeline_mode = #tpu.pipeline_mode<synchronous>, transform_indices = @transform_3, window_bounds = array<i64: 128, 128>}, {pipeline_mode = #tpu.pipeline_mode<synchronous>, transform_indices = @transform_4, window_bounds = array<i64: 1, 128>}, {pipeline_mode = #tpu.pipeline_mode<synchronous>, transform_indices = @transform_5, window_bounds = array<i64: 128, 128>}, {pipeline_mode = #tpu.pipeline_mode<synchronous>, transform_indices = @transform_6, window_bounds = array<i64: 1, 128>}, {transform_indices = @transform_7, window_bounds = array<i64: 128, 128>}]} {
    %c0 = arith.constant 0 : index
    %c0_0 = arith.constant 0 : index
    %0 = vector.load %arg1[%c0, %c0_0] : memref<128x784xf32, #tpu.memory_space<vmem>>, vector<128x784xf32>
    %c0_1 = arith.constant 0 : index
    %c0_2 = arith.constant 0 : index
    %1 = vector.load %arg2[%c0_1, %c0_2] : memref<784x128xf32, #tpu.memory_space<vmem>>, vector<784x128xf32>
    %cst = arith.constant dense<0.000000e+00> : vector<128x128xf32>
    %2 = tpu.matmul %0, %1, %cst {dimension_numbers = #tpu.dot_dimension_numbers<[1], [0], [0], [1], [0, 0, 1, 1], [], []>} : vector<128x784xf32>, vector<784x128xf32>, vector<128x128xf32> -> vector<128x128xf32>
    %c0_3 = arith.constant 0 : index
    %c0_4 = arith.constant 0 : index
    %3 = vector.load %arg3[%c0_3, %c0_4] : memref<1x128xf32, #tpu.memory_space<vmem>>, vector<1x128xf32>
    %4 = vector.broadcast %3 : vector<1x128xf32> to vector<128x128xf32>
    %5 = arith.addf %2, %4 : vector<128x128xf32>
    %cst_5 = arith.constant 0.000000e+00 : f32
    %6 = vector.broadcast %cst_5 : f32 to vector<128x128xf32>
    %7 = arith.maximumf %5, %6 : vector<128x128xf32>
    %c0_6 = arith.constant 0 : index
    %c0_7 = arith.constant 0 : index
    %8 = vector.load %arg4[%c0_6, %c0_7] : memref<128x128xf32, #tpu.memory_space<vmem>>, vector<128x128xf32>
    %cst_8 = arith.constant dense<0.000000e+00> : vector<128x128xf32>
    %9 = tpu.matmul %7, %8, %cst_8 {dimension_numbers = #tpu.dot_dimension_numbers<[1], [0], [0], [1], [0, 0, 1, 1], [], []>} : vector<128x128xf32>, vector<128x128xf32>, vector<128x128xf32> -> vector<128x128xf32>
    %c0_9 = arith.constant 0 : index
    %c0_10 = arith.constant 0 : index
    %10 = vector.load %arg5[%c0_9, %c0_10] : memref<1x128xf32, #tpu.memory_space<vmem>>, vector<1x128xf32>
    %11 = vector.broadcast %10 : vector<1x128xf32> to vector<128x128xf32>
    %12 = arith.addf %9, %11 : vector<128x128xf32>
    %cst_11 = arith.constant 0.000000e+00 : f32
    %13 = vector.broadcast %cst_11 : f32 to vector<128x128xf32>
    %14 = arith.maximumf %12, %13 : vector<128x128xf32>
    %c0_12 = arith.constant 0 : index
    %c0_13 = arith.constant 0 : index
    %15 = vector.load %arg6[%c0_12, %c0_13] : memref<128x128xf32, #tpu.memory_space<vmem>>, vector<128x128xf32>
    %cst_14 = arith.constant dense<0.000000e+00> : vector<128x128xf32>
    %16 = tpu.matmul %14, %15, %cst_14 {dimension_numbers = #tpu.dot_dimension_numbers<[1], [0], [0], [1], [0, 0, 1, 1], [], []>} : vector<128x128xf32>, vector<128x128xf32>, vector<128x128xf32> -> vector<128x128xf32>
    %c0_15 = arith.constant 0 : index
    %c0_16 = arith.constant 0 : index
    %17 = vector.load %arg7[%c0_15, %c0_16] : memref<1x128xf32, #tpu.memory_space<vmem>>, vector<1x128xf32>
    %18 = vector.broadcast %17 : vector<1x128xf32> to vector<128x128xf32>
    %19 = arith.addf %16, %18 : vector<128x128xf32>
    %c0_17 = arith.constant 0 : index
    %c0_18 = arith.constant 0 : index
    %20 = vector.load %arg8[%c0_17, %c0_18] : memref<128x128xf32, #tpu.memory_space<vmem>>, vector<128x128xf32>
    tpu.vector_store %arg8[%c0_17, %c0_18], %19 {strides = array<i32>} : memref<128x128xf32, #tpu.memory_space<vmem>>, vector<128x128xf32>,
    return
  }
  func.func @transform_0(%arg0: i32) -> (i32, i32) {
    %c0_i32 = arith.constant 0 : i32
    %c0_i32_0 = arith.constant 0 : i32
    return %arg0, %c0_i32 : i32, i32
  }
  func.func @transform_1(%arg0: i32) -> (i32, i32) {
    %c0_i32 = arith.constant 0 : i32
    %c0_i32_0 = arith.constant 0 : i32
    %c0_i32_1 = arith.constant 0 : i32
    return %c0_i32, %c0_i32_0 : i32, i32
  }
  func.func @transform_2(%arg0: i32) -> (i32, i32) {
    %c0_i32 = arith.constant 0 : i32
    %c0_i32_0 = arith.constant 0 : i32
    %c0_i32_1 = arith.constant 0 : i32
    return %c0_i32, %c0_i32_0 : i32, i32
  }
  func.func @transform_3(%arg0: i32) -> (i32, i32) {
    %c0_i32 = arith.constant 0 : i32
    %c0_i32_0 = arith.constant 0 : i32
    %c0_i32_1 = arith.constant 0 : i32
    return %c0_i32, %c0_i32_0 : i32, i32
  }
  func.func @transform_4(%arg0: i32) -> (i32, i32) {
    %c0_i32 = arith.constant 0 : i32
    %c0_i32_0 = arith.constant 0 : i32
    %c0_i32_1 = arith.constant 0 : i32
    return %c0_i32, %c0_i32_0 : i32, i32
  }
  func.func @transform_5(%arg0: i32) -> (i32, i32) {
    %c0_i32 = arith.constant 0 : i32
    %c0_i32_0 = arith.constant 0 : i32
    %c0_i32_1 = arith.constant 0 : i32
    return %c0_i32, %c0_i32_0 : i32, i32
  }
  func.func @transform_6(%arg0: i32) -> (i32, i32) {
    %c0_i32 = arith.constant 0 : i32
    %c0_i32_0 = arith.constant 0 : i32
    %c0_i32_1 = arith.constant 0 : i32
    return %c0_i32, %c0_i32_0 : i32, i32
  }
  func.func @transform_7(%arg0: i32) -> (i32, i32) {
    %c0_i32 = arith.constant 0 : i32
    %c0_i32_0 = arith.constant 0 : i32
    return %arg0, %c0_i32 : i32, i32
  }
}

</mosaic_0001>

<llo_original>
// kernel: tpu_custom_call.1
$region0: #{tpu_custom_call.1}
  #allocation0 [shape = 'u32[]', space=smem, size = 0x4, offset = 0x4, fixed_abs, tag = 'smem constant byte address 0x4 - core index']
  #allocation1 [shape = 'u32[144,128]{1,0:T(1,128)}', space=vmem, size = 0x12000, scoped, tag = 'internal scratch']
  %s0 = inlined_call_operand.vmem [shape: f32[256,784], index: 0, kind: input, shape index: {}]
  %s1 = inlined_call_operand.vmem [shape: f32[784,128], index: 1, kind: input, shape index: {}]
  %s2 = inlined_call_operand.vmem [shape: f32[1,128], index: 2, kind: input, shape index: {}]
  %s3 = inlined_call_operand.vmem [shape: f32[128,128], index: 3, kind: input, shape index: {}]
  %s4 = inlined_call_operand.vmem [shape: f32[1,128], index: 4, kind: input, shape index: {}]
  %s5 = inlined_call_operand.vmem [shape: f32[128,128], index: 5, kind: input, shape index: {}]
  %s6 = inlined_call_operand.vmem [shape: f32[1,128], index: 6, kind: input, shape index: {}]
  %s7 = inlined_call_operand.hbm [shape: f32[256,128], index: 7, kind: output, shape index: {}]
  %s8 = sld [smem:[#allocation0]]
  $region61: #{tpu_custom_call.1} parent=0
    _
  %s10 = ssub.s32 1, %s8
  %s11 = scalar_select 0, %s10, %s8
  $region1: #{tpu_custom_call.1} parent=0
    #allocation2 [shape = 'u8[131072]{0}', space=vmem, size = 0x20000, scoped, tag = 'output window, operand 0']
    #allocation3 [shape = 's32[2]{0}', space=sflag, size = 0x8, scoped, tag = 'scoped memory for tpu_custom_call.1']
    %12 = vsyncpa [#allocation3], 0
    %s13 = scalar_lea.sflag [#allocation3], 1
    %14 = vsyncpa %s13, 0
    loop: start=0, step=1, limit=4
    $region2: #{tpu_custom_call.1} parent=1 // loop_pre_header
      _
    $region3: #{tpu_custom_call.1} parent=1 // loop_header
      %s16 = sphi 0, %s20
      %p17 = scmp.ge.s32.totalorder %s16, 4
      %s26 = sphi 0, %s28
      %s29 = sphi 0, %s26
      %s30 = sphi 0, %s29
      %s46 = sphi 0, %s30
      %s50 = sphi 0, %s50
      %s52 = sphi 0, %s50
      %s53 = sphi 0, %s52
      %s67 = sphi 0, %s53
      %s71 = sphi 0, %s71
      %s73 = sphi 0, %s71
      %s74 = sphi 0, %s73
      %s88 = sphi 0, %s74
      %s92 = sphi 0, %s92
      %s94 = sphi 0, %s92
      %s95 = sphi 0, %s94
      %s109 = sphi 0, %s95
      %s113 = sphi 0, %s113
      %s115 = sphi 0, %s113
      %s116 = sphi 0, %s115
      %s130 = sphi 0, %s116
      %s134 = sphi 0, %s134
      %s136 = sphi 0, %s134
      %s137 = sphi 0, %s136
      %s151 = sphi 0, %s137
      %s155 = sphi 0, %s155
      %s157 = sphi 0, %s155
      %s158 = sphi 0, %s157
      %s172 = sphi 0, %s158
      %s178 = sphi 0, %s180
      %s181 = sphi 0, %s178
      %s182 = sphi 0, %s181
      %s198 = sphi 0, %s182
    $region4: #{tpu_custom_call.1} parent=1 // loop_header_branch
      %19 = sbr.rel (%p17) target = $region8
    $region5: #{tpu_custom_call.1} parent=1 // loop_body
      %s21 = ssub.s32 %s16, 1
      %s22 = ssub.s32 %s16, 2
      %s23 = sadd.s32 %s16, 1
      %s24 = ssub.s32 %s16, %s23
      %p25 = scmp.eq.s32.totalorder %s24, 0
      %s27 = sadd.s32 %s26, 1
      %s28 = scalar_select %p25, %s26, %s27
      %p31 = pneg %p25
      %p32 = scmp.eq.s32.totalorder %s16, 1
      %p33 = por %p31, %p32
      %p34 = scmp.ne.s32.totalorder %s26, %s29
      %p35 = scmp.eq.s32.totalorder %s16, 0
      %p36 = por %p34, %p35
      %p37 = scmp.ne.s32.totalorder %s26, %s29
      %p38 = scmp.eq.s32.totalorder %s21, 1
      %p39 = por %p37, %p38
      %p40 = scmp.ne.s32.totalorder %s29, %s30
      %p41 = scmp.eq.s32.totalorder %s21, 0
      %p42 = por %p40, %p41
      %p43 = scmp.ne.s32.totalorder %s29, %s30
      %p44 = scmp.eq.s32.totalorder %s22, 1
      %p45 = por %p43, %p44
      %p47 = scmp.ne.s32.totalorder %s30, %s46
      %p48 = scmp.eq.s32.totalorder %s22, 0
      %p49 = por %p47, %p48
      %s51 = sadd.s32 %s50, 1
      %p54 = scmp.eq.s32.totalorder %s16, 1
      %p55 = scmp.ne.s32.totalorder %s50, %s52
      %p56 = scmp.eq.s32.totalorder %s16, 0
      %p57 = por %p55, %p56
      %p58 = scmp.ne.s32.totalorder %s50, %s52
      %p59 = scmp.eq.s32.totalorder %s21, 1
      %p60 = por %p58, %p59
      %p61 = scmp.ne.s32.totalorder %s52, %s53
      %p62 = scmp.eq.s32.totalorder %s21, 0
      %p63 = por %p61, %p62
      %p64 = scmp.ne.s32.totalorder %s52, %s53
      %p65 = scmp.eq.s32.totalorder %s22, 1
      %p66 = por %p64, %p65
      %p68 = scmp.ne.s32.totalorder %s53, %s67
      %p69 = scmp.eq.s32.totalorder %s22, 0
      %p70 = por %p68, %p69
      %s72 = sadd.s32 %s71, 1
      %p75 = scmp.eq.s32.totalorder %s16, 1
      %p76 = scmp.ne.s32.totalorder %s71, %s73
      %p77 = scmp.eq.s32.totalorder %s16, 0
      %p78 = por %p76, %p77
      %p79 = scmp.ne.s32.totalorder %s71, %s73
      %p80 = scmp.eq.s32.totalorder %s21, 1
      %p81 = por %p79, %p80
      %p82 = scmp.ne.s32.totalorder %s73, %s74
      %p83 = scmp.eq.s32.totalorder %s21, 0
      %p84 = por %p82, %p83
      %p85 = scmp.ne.s32.totalorder %s73, %s74
      %p86 = scmp.eq.s32.totalorder %s22, 1
      %p87 = por %p85, %p86
      %p89 = scmp.ne.s32.totalorder %s74, %s88
      %p90 = scmp.eq.s32.totalorder %s22, 0
      %p91 = por %p89, %p90
      %s93 = sadd.s32 %s92, 1
      %p96 = scmp.eq.s32.totalorder %s16, 1
      %p97 = scmp.ne.s32.totalorder %s92, %s94
      %p98 = scmp.eq.s32.totalorder %s16, 0
      %p99 = por %p97, %p98
      %p100 = scmp.ne.s32.totalorder %s92, %s94
      %p101 = scmp.eq.s32.totalorder %s21, 1
      %p102 = por %p100, %p101
      %p103 = scmp.ne.s32.totalorder %s94, %s95
      %p104 = scmp.eq.s32.totalorder %s21, 0
      %p105 = por %p103, %p104
      %p106 = scmp.ne.s32.totalorder %s94, %s95
      %p107 = scmp.eq.s32.totalorder %s22, 1
      %p108 = por %p106, %p107
      %p110 = scmp.ne.s32.totalorder %s95, %s109
      %p111 = scmp.eq.s32.totalorder %s22, 0
      %p112 = por %p110, %p111
      %s114 = sadd.s32 %s113, 1
      %p117 = scmp.eq.s32.totalorder %s16, 1
      %p118 = scmp.ne.s32.totalorder %s113, %s115
      %p119 = scmp.eq.s32.totalorder %s16, 0
      %p120 = por %p118, %p119
      %p121 = scmp.ne.s32.totalorder %s113, %s115
      %p122 = scmp.eq.s32.totalorder %s21, 1
      %p123 = por %p121, %p122
      %p124 = scmp.ne.s32.totalorder %s115, %s116
      %p125 = scmp.eq.s32.totalorder %s21, 0
      %p126 = por %p124, %p125
      %p127 = scmp.ne.s32.totalorder %s115, %s116
      %p128 = scmp.eq.s32.totalorder %s22, 1
      %p129 = por %p127, %p128
      %p131 = scmp.ne.s32.totalorder %s116, %s130
      %p132 = scmp.eq.s32.totalorder %s22, 0
      %p133 = por %p131, %p132
      %s135 = sadd.s32 %s134, 1
      %p138 = scmp.eq.s32.totalorder %s16, 1
      %p139 = scmp.ne.s32.totalorder %s134, %s136
      %p140 = scmp.eq.s32.totalorder %s16, 0
      %p141 = por %p139, %p140
      %p142 = scmp.ne.s32.totalorder %s134, %s136
      %p143 = scmp.eq.s32.totalorder %s21, 1
      %p144 = por %p142, %p143
      %p145 = scmp.ne.s32.totalorder %s136, %s137
      %p146 = scmp.eq.s32.totalorder %s21, 0
      %p147 = por %p145, %p146
      %p148 = scmp.ne.s32.totalorder %s136, %s137
      %p149 = scmp.eq.s32.totalorder %s22, 1
      %p150 = por %p148, %p149
      %p152 = scmp.ne.s32.totalorder %s137, %s151
      %p153 = scmp.eq.s32.totalorder %s22, 0
      %p154 = por %p152, %p153
      %s156 = sadd.s32 %s155, 1
      %p159 = scmp.eq.s32.totalorder %s16, 1
      %p160 = scmp.ne.s32.totalorder %s155, %s157
      %p161 = scmp.eq.s32.totalorder %s16, 0
      %p162 = por %p160, %p161
      %p163 = scmp.ne.s32.totalorder %s155, %s157
      %p164 = scmp.eq.s32.totalorder %s21, 1
      %p165 = por %p163, %p164
      %p166 = scmp.ne.s32.totalorder %s157, %s158
      %p167 = scmp.eq.s32.totalorder %s21, 0
      %p168 = por %p166, %p167
      %p169 = scmp.ne.s32.totalorder %s157, %s158
      %p170 = scmp.eq.s32.totalorder %s22, 1
      %p171 = por %p169, %p170
      %p173 = scmp.ne.s32.totalorder %s158, %s172
      %p174 = scmp.eq.s32.totalorder %s22, 0
      %p175 = por %p173, %p174
      %s176 = ssub.s32 %s16, %s23
      %p177 = scmp.eq.s32.totalorder %s176, 0
      %s179 = sadd.s32 %s178, 1
      %s180 = scalar_select %p177, %s178, %s179
      %p183 = pneg %p177
      %p184 = scmp.eq.s32.totalorder %s16, 1
      %p185 = por %p183, %p184
      %p186 = scmp.ne.s32.totalorder %s178, %s181
      %p187 = scmp.eq.s32.totalorder %s16, 0
      %p188 = por %p186, %p187
      %p189 = scmp.ne.s32.totalorder %s178, %s181
      %p190 = scmp.eq.s32.totalorder %s21, 1
      %p191 = por %p189, %p190
      %p192 = scmp.ne.s32.totalorder %s181, %s182
      %p193 = scmp.eq.s32.totalorder %s21, 0
      %p194 = por %p192, %p193
      %p195 = scmp.ne.s32.totalorder %s181, %s182
      %p196 = scmp.eq.s32.totalorder %s22, 1
      %p197 = por %p195, %p196
      %p199 = scmp.ne.s32.totalorder %s182, %s198
      %p200 = scmp.eq.s32.totalorder %s22, 0
      %p201 = por %p199, %p200
      %p202 = scmp.le.s32.totalorder 1, %s16
      %p203 = scmp.lt.s32.totalorder %s16, 3
      %p204 = pnand %p202, %p203
      %p205 = pneg %p204
      // Predicated region
      $region9: #{tpu_custom_call.1} parent=5 // pred_check
        _
      $region10: #{tpu_custom_call.1} parent=5 // pred_check_branch
        %207 = sbr.rel (%p204) target = $region12
      $region11: #{tpu_custom_call.1} parent=5 // pred_region
        %s208 = ssub.s32 %s16, 1
        // Predicated region
        $region13: #{tpu_custom_call.1} parent=11 // pred_check
          %p209 = pneg %p63
        $region14: #{tpu_custom_call.1} parent=11 // pred_check_branch
          %211 = sbr.rel (%p209) target = $region16
        $region15: #{tpu_custom_call.1} parent=11 // pred_region
          _
        $region16: #{tpu_custom_call.1} parent=11 // pred_fallthru
          _
        // Predicated region
        $region17: #{tpu_custom_call.1} parent=11 // pred_check
          %p212 = pneg %p84
        $region18: #{tpu_custom_call.1} parent=11 // pred_check_branch
          %214 = sbr.rel (%p212) target = $region20
        $region19: #{tpu_custom_call.1} parent=11 // pred_region
          _
        $region20: #{tpu_custom_call.1} parent=11 // pred_fallthru
          _
        // Predicated region
        $region21: #{tpu_custom_call.1} parent=11 // pred_check
          %p215 = pneg %p105
        $region22: #{tpu_custom_call.1} parent=11 // pred_check_branch
          %217 = sbr.rel (%p215) target = $region24
        $region23: #{tpu_custom_call.1} parent=11 // pred_region
          _
        $region24: #{tpu_custom_call.1} parent=11 // pred_fallthru
          _
        // Predicated region
        $region25: #{tpu_custom_call.1} parent=11 // pred_check
          %p218 = pneg %p126
        $region26: #{tpu_custom_call.1} parent=11 // pred_check_branch
          %220 = sbr.rel (%p218) target = $region28
        $region27: #{tpu_custom_call.1} parent=11 // pred_region
          _
        $region28: #{tpu_custom_call.1} parent=11 // pred_fallthru
          _
        // Predicated region
        $region29: #{tpu_custom_call.1} parent=11 // pred_check
          %p221 = pneg %p147
        $region30: #{tpu_custom_call.1} parent=11 // pred_check_branch
          %223 = sbr.rel (%p221) target = $region32
        $region31: #{tpu_custom_call.1} parent=11 // pred_region
          _
        $region32: #{tpu_custom_call.1} parent=11 // pred_fallthru
          _
        // Predicated region
        $region33: #{tpu_custom_call.1} parent=11 // pred_check
          %p224 = pneg %p168
        $region34: #{tpu_custom_call.1} parent=11 // pred_check_branch
          %226 = sbr.rel (%p224) target = $region36
        $region35: #{tpu_custom_call.1} parent=11 // pred_region
          _
        $region36: #{tpu_custom_call.1} parent=11 // pred_fallthru
          _
      $region12: #{tpu_custom_call.1} parent=5 // pred_fallthru
        _
      %p227 = scmp.lt.s32.totalorder %s16, 2
      // Predicated region
      $region37: #{tpu_custom_call.1} parent=5 // pred_check
        %p228 = pneg %p227
      $region38: #{tpu_custom_call.1} parent=5 // pred_check_branch
        %230 = sbr.rel (%p228) target = $region40
      $region39: #{tpu_custom_call.1} parent=5 // pred_region
        // Predicated region
        $region41: #{tpu_custom_call.1} parent=39 // pred_check
          %p231 = pneg %p36
        $region42: #{tpu_custom_call.1} parent=39 // pred_check_branch
          %233 = sbr.rel (%p231) target = $region44
        $region43: #{tpu_custom_call.1} parent=39 // pred_region
          %s234 = smul.u32 16, %s16
          %p235 = scmp.lt.s32.totalorder %s234, 31
          %s236 = scalar_select %p235, %s234, 31
          %s237 = smul.addr %s236, 7
          %s238 = smul.addr %s237, 8
          %s239 = scalar_lea.vmem %s0, %s238
          %s240 = smul.u32 16, %s16
        $region44: #{tpu_custom_call.1} parent=39 // pred_fallthru
          _
      $region40: #{tpu_custom_call.1} parent=5 // pred_fallthru
        _
      %p241 = scmp.le.s32.totalorder 1, %s16
      %p242 = scmp.lt.s32.totalorder %s16, 3
      %p243 = pnand %p241, %p242
      %p244 = pneg %p243
      // Predicated region
      $region45: #{tpu_custom_call.1} parent=5 // pred_check
        _
      $region46: #{tpu_custom_call.1} parent=5 // pred_check_branch
        %246 = sbr.rel (%p243) target = $region48
      $region47: #{tpu_custom_call.1} parent=5 // pred_region
        %s247 = ssub.s32 %s16, 1
        %s248 = smul.u32 16, %s21
        %p249 = scmp.lt.s32.totalorder %s248, 31
        %s250 = scalar_select %p249, %s248, 31
        %s251 = smul.addr %s250, 7
        %s252 = smul.addr %s251, 8
        %s253 = scalar_lea.vmem %s0, %s252
        %p254 = pneg %p42
        %p255 = pneg %p39
        %p256 = pneg %p63
        %p257 = pneg %p60
        %p258 = pneg %p84
        %p259 = pneg %p81
        %p260 = pneg %p105
        %p261 = pneg %p102
        %p262 = pneg %p126
        %p263 = pneg %p123
        %p264 = pneg %p147
        %p265 = pneg %p144
        %p266 = pneg %p168
        %p267 = pneg %p165
        %p268 = pneg %p194
        %p269 = pneg %p191
        %s270 = sand.u32 %s181, 1
        %s271 = scalar_lea.sflag [#allocation3], %s270
        %s272 = sand.u32 %s181, 1
        %s273 = smul.addr %s272, 128
        %s274 = scalar_lea.vmem [#allocation2], %s273
        %s275 = smul.u32 16, %s21
        %p276 = scmp.lt.s32.totalorder %s275, 31
        %s277 = scalar_select %p276, %s275, 31
        %s278 = smul.addr %s277, 7
        %s279 = smul.addr %s278, 8
        %s280 = scalar_lea.vmem %s0, %s279
        %s281 = smul.u32 16, %s21
        %s282 = smul.u32 16, %s21
        %v283 = vld [vmem:[%s280] sm:$0xff]
        %v284 = vld [vmem:[%s280 + $0x8] sm:$0xff]
        %v285 = vld [vmem:[%s280 + $0x10] sm:$0xff]
        %v286 = vld [vmem:[%s280 + $0x18] sm:$0xff]
        %v287 = vld [vmem:[%s280 + $0x20] sm:$0xff]
        %v288 = vld [vmem:[%s280 + $0x28] sm:$0xff]
        %v289 = vld [vmem:[%s280 + $0x30] sm:$0xff]
        %v290 = vld [vmem:[%s280 + $0x38] sm:$0xff]
        %v291 = vld [vmem:[%s280 + $0x40] sm:$0xff]
        %v292 = vld [vmem:[%s280 + $0x48] sm:$0xff]
        %v293 = vld [vmem:[%s280 + $0x50] sm:$0xff]
        %v294 = vld [vmem:[%s280 + $0x58] sm:$0xff]
        %v295 = vld [vmem:[%s280 + $0x60] sm:$0xff]
        %v296 = vld [vmem:[%s280 + $0x68] sm:$0xff]
        %v297 = vld [vmem:[%s280 + $0x70] sm:$0xff]
        %v298 = vld [vmem:[%s280 + $0x78] sm:$0xff]
        %v299 = vld [vmem:[%s280 + $0x80] sm:$0xff]
        %v300 = vld [vmem:[%s280 + $0x88] sm:$0xff]
        %v301 = vld [vmem:[%s280 + $0x90] sm:$0xff]
        %v302 = vld [vmem:[%s280 + $0x98] sm:$0xff]
        %v303 = vld [vmem:[%s280 + $0xa0] sm:$0xff]
        %v304 = vld [vmem:[%s280 + $0xa8] sm:$0xff]
        %v305 = vld [vmem:[%s280 + $0xb0] sm:$0xff]
        %v306 = vld [vmem:[%s280 + $0xb8] sm:$0xff]
        %v307 = vld [vmem:[%s280 + $0xc0] sm:$0xff]
        %v308 = vld [vmem:[%s280 + $0xc8] sm:$0xff]
        %v309 = vld [vmem:[%s280 + $0xd0] sm:$0xff]
        %v310 = vld [vmem:[%s280 + $0xd8] sm:$0xff]
        %v311 = vld [vmem:[%s280 + $0xe0] sm:$0xff]
        %v312 = vld [vmem:[%s280 + $0xe8] sm:$0xff]
        %v313 = vld [vmem:[%s280 + $0xf0] sm:$0xff]
        %v314 = vld [vmem:[%s280 + $0xf8] sm:$0xff]
        %v315 = vld [vmem:[%s280 + $0x100] sm:$0xff]
        %v316 = vld [vmem:[%s280 + $0x108] sm:$0xff]
        %v317 = vld [vmem:[%s280 + $0x110] sm:$0xff]
        %v318 = vld [vmem:[%s280 + $0x118] sm:$0xff]
        %v319 = vld [vmem:[%s280 + $0x120] sm:$0xff]
        %v320 = vld [vmem:[%s280 + $0x128] sm:$0xff]
        %v321 = vld [vmem:[%s280 + $0x130] sm:$0xff]
        %v322 = vld [vmem:[%s280 + $0x138] sm:$0xff]
        %v323 = vld [vmem:[%s280 + $0x140] sm:$0xff]
        %v324 = vld [vmem:[%s280 + $0x148] sm:$0xff]
        %v325 = vld [vmem:[%s280 + $0x150] sm:$0xff]
        %v326 = vld [vmem:[%s280 + $0x158] sm:$0xff]
        %v327 = vld [vmem:[%s280 + $0x160] sm:$0xff]
        %v328 = vld [vmem:[%s280 + $0x168] sm:$0xff]
        %v329 = vld [vmem:[%s280 + $0x170] sm:$0xff]
        %v330 = vld [vmem:[%s280 + $0x178] sm:$0xff]
        %v331 = vld [vmem:[%s280 + $0x180] sm:$0xff]
        %v332 = vld [vmem:[%s280 + $0x188] sm:$0xff]
        %v333 = vld [vmem:[%s280 + $0x190] sm:$0xff]
        %v334 = vld [vmem:[%s280 + $0x198] sm:$0xff]
        %v335 = vld [vmem:[%s280 + $0x1a0] sm:$0xff]
        %v336 = vld [vmem:[%s280 + $0x1a8] sm:$0xff]
        %v337 = vld [vmem:[%s280 + $0x1b0] sm:$0xff]
        %v338 = vld [vmem:[%s280 + $0x1b8] sm:$0xff]
        %v339 = vld [vmem:[%s280 + $0x1c0] sm:$0xff]
        %v340 = vld [vmem:[%s280 + $0x1c8] sm:$0xff]
        %v341 = vld [vmem:[%s280 + $0x1d0] sm:$0xff]
        %v342 = vld [vmem:[%s280 + $0x1d8] sm:$0xff]
        %v343 = vld [vmem:[%s280 + $0x1e0] sm:$0xff]
        %v344 = vld [vmem:[%s280 + $0x1e8] sm:$0xff]
        %v345 = vld [vmem:[%s280 + $0x1f0] sm:$0xff]
        %v346 = vld [vmem:[%s280 + $0x1f8] sm:$0xff]
        %v347 = vld [vmem:[%s280 + $0x200] sm:$0xff]
        %v348 = vld [vmem:[%s280 + $0x208] sm:$0xff]
        %v349 = vld [vmem:[%s280 + $0x210] sm:$0xff]
        %v350 = vld [vmem:[%s280 + $0x218] sm:$0xff]
        %v351 = vld [vmem:[%s280 + $0x220] sm:$0xff]
        %v352 = vld [vmem:[%s280 + $0x228] sm:$0xff]
        %v353 = vld [vmem:[%s280 + $0x230] sm:$0xff]
        %v354 = vld [vmem:[%s280 + $0x238] sm:$0xff]
        %v355 = vld [vmem:[%s280 + $0x240] sm:$0xff]
        %v356 = vld [vmem:[%s280 + $0x248] sm:$0xff]
        %v357 = vld [vmem:[%s280 + $0x250] sm:$0xff]
        %v358 = vld [vmem:[%s280 + $0x258] sm:$0xff]
        %v359 = vld [vmem:[%s280 + $0x260] sm:$0xff]
        %v360 = vld [vmem:[%s280 + $0x268] sm:$0xff]
        %v361 = vld [vmem:[%s280 + $0x270] sm:$0xff]
        %v362 = vld [vmem:[%s280 + $0x278] sm:$0xff]
        %v363 = vld [vmem:[%s280 + $0x280] sm:$0xff]
        %v364 = vld [vmem:[%s280 + $0x288] sm:$0xff]
        %v365 = vld [vmem:[%s280 + $0x290] sm:$0xff]
        %v366 = vld [vmem:[%s280 + $0x298] sm:$0xff]
        %v367 = vld [vmem:[%s280 + $0x2a0] sm:$0xff]
        %v368 = vld [vmem:[%s280 + $0x2a8] sm:$0xff]
        %v369 = vld [vmem:[%s280 + $0x2b0] sm:$0xff]
        %v370 = vld [vmem:[%s280 + $0x2b8] sm:$0xff]
        %v371 = vld [vmem:[%s280 + $0x2c0] sm:$0xff]
        %v372 = vld [vmem:[%s280 + $0x2c8] sm:$0xff]
        %v373 = vld [vmem:[%s280 + $0x2d0] sm:$0xff]
        %v374 = vld [vmem:[%s280 + $0x2d8] sm:$0xff]
        %v375 = vld [vmem:[%s280 + $0x2e0] sm:$0xff]
        %v376 = vld [vmem:[%s280 + $0x2e8] sm:$0xff]
        %v377 = vld [vmem:[%s280 + $0x2f0] sm:$0xff]
        %v378 = vld [vmem:[%s280 + $0x2f8] sm:$0xff]
        %v379 = vld [vmem:[%s280 + $0x300] sm:$0xff]
        %v380 = vld [vmem:[%s280 + $0x308] sm:$0xff]
        %v381 = vld [vmem:[%s280 + $0x310] sm:$0xff]
        %v382 = vld [vmem:[%s280 + $0x318] sm:$0xff]
        %v383 = vld [vmem:[%s280 + $0x320] sm:$0xff]
        %v384 = vld [vmem:[%s280 + $0x328] sm:$0xff]
        %v385 = vld [vmem:[%s280 + $0x330] sm:$0xff]
        %v386 = vld [vmem:[%s280 + $0x338] sm:$0xff]
        %v387 = vld [vmem:[%s280 + $0x340] sm:$0xff]
        %v388 = vld [vmem:[%s280 + $0x348] sm:$0xff]
        %v389 = vld [vmem:[%s280 + $0x350] sm:$0xff]
        %v390 = vld [vmem:[%s280 + $0x358] sm:$0xff]
        %v391 = vld [vmem:[%s280 + $0x360] sm:$0xff]
        %v392 = vld [vmem:[%s280 + $0x368] sm:$0xff]
        %v393 = vld [vmem:[%s280 + $0x370] sm:$0xff]
        %v394 = vld [vmem:[%s280 + $0x378] sm:$0xff]
        %v395 = vld [vmem:[%s1] sm:$0xff]
        %v396 = vld [vmem:[%s1 + $0x8] sm:$0xff]
        %v397 = vld [vmem:[%s1 + $0x10] sm:$0xff]
        %v398 = vld [vmem:[%s1 + $0x18] sm:$0xff]
        %v399 = vld [vmem:[%s1 + $0x20] sm:$0xff]
        %v400 = vld [vmem:[%s1 + $0x28] sm:$0xff]
        %v401 = vld [vmem:[%s1 + $0x30] sm:$0xff]
        %v402 = vld [vmem:[%s1 + $0x38] sm:$0xff]
        %v403 = vld [vmem:[%s1 + $0x40] sm:$0xff]
        %v404 = vld [vmem:[%s1 + $0x48] sm:$0xff]
        %v405 = vld [vmem:[%s1 + $0x50] sm:$0xff]
        %v406 = vld [vmem:[%s1 + $0x58] sm:$0xff]
        %v407 = vld [vmem:[%s1 + $0x60] sm:$0xff]
        %v408 = vld [vmem:[%s1 + $0x68] sm:$0xff]
        %v409 = vld [vmem:[%s1 + $0x70] sm:$0xff]
        %v410 = vld [vmem:[%s1 + $0x78] sm:$0xff]
        %v411 = vld [vmem:[%s1 + $0x80] sm:$0xff]
        %v412 = vld [vmem:[%s1 + $0x88] sm:$0xff]
        %v413 = vld [vmem:[%s1 + $0x90] sm:$0xff]
        %v414 = vld [vmem:[%s1 + $0x98] sm:$0xff]
        %v415 = vld [vmem:[%s1 + $0xa0] sm:$0xff]
        %v416 = vld [vmem:[%s1 + $0xa8] sm:$0xff]
        %v417 = vld [vmem:[%s1 + $0xb0] sm:$0xff]
        %v418 = vld [vmem:[%s1 + $0xb8] sm:$0xff]
        %v419 = vld [vmem:[%s1 + $0xc0] sm:$0xff]
        %v420 = vld [vmem:[%s1 + $0xc8] sm:$0xff]
        %v421 = vld [vmem:[%s1 + $0xd0] sm:$0xff]
        %v422 = vld [vmem:[%s1 + $0xd8] sm:$0xff]
        %v423 = vld [vmem:[%s1 + $0xe0] sm:$0xff]
        %v424 = vld [vmem:[%s1 + $0xe8] sm:$0xff]
        %v425 = vld [vmem:[%s1 + $0xf0] sm:$0xff]
        %v426 = vld [vmem:[%s1 + $0xf8] sm:$0xff]
        %v427 = vld [vmem:[%s1 + $0x100] sm:$0xff]
        %v428 = vld [vmem:[%s1 + $0x108] sm:$0xff]
        %v429 = vld [vmem:[%s1 + $0x110] sm:$0xff]
        %v430 = vld [vmem:[%s1 + $0x118] sm:$0xff]
        %v431 = vld [vmem:[%s1 + $0x120] sm:$0xff]
        %v432 = vld [vmem:[%s1 + $0x128] sm:$0xff]
        %v433 = vld [vmem:[%s1 + $0x130] sm:$0xff]
        %v434 = vld [vmem:[%s1 + $0x138] sm:$0xff]
        %v435 = vld [vmem:[%s1 + $0x140] sm:$0xff]
        %v436 = vld [vmem:[%s1 + $0x148] sm:$0xff]
        %v437 = vld [vmem:[%s1 + $0x150] sm:$0xff]
        %v438 = vld [vmem:[%s1 + $0x158] sm:$0xff]
        %v439 = vld [vmem:[%s1 + $0x160] sm:$0xff]
        %v440 = vld [vmem:[%s1 + $0x168] sm:$0xff]
        %v441 = vld [vmem:[%s1 + $0x170] sm:$0xff]
        %v442 = vld [vmem:[%s1 + $0x178] sm:$0xff]
        %v443 = vld [vmem:[%s1 + $0x180] sm:$0xff]
        %v444 = vld [vmem:[%s1 + $0x188] sm:$0xff]
        %v445 = vld [vmem:[%s1 + $0x190] sm:$0xff]
        %v446 = vld [vmem:[%s1 + $0x198] sm:$0xff]
        %v447 = vld [vmem:[%s1 + $0x1a0] sm:$0xff]
        %v448 = vld [vmem:[%s1 + $0x1a8] sm:$0xff]
        %v449 = vld [vmem:[%s1 + $0x1b0] sm:$0xff]
        %v450 = vld [vmem:[%s1 + $0x1b8] sm:$0xff]
        %v451 = vld [vmem:[%s1 + $0x1c0] sm:$0xff]
        %v452 = vld [vmem:[%s1 + $0x1c8] sm:$0xff]
        %v453 = vld [vmem:[%s1 + $0x1d0] sm:$0xff]
        %v454 = vld [vmem:[%s1 + $0x1d8] sm:$0xff]
        %v455 = vld [vmem:[%s1 + $0x1e0] sm:$0xff]
        %v456 = vld [vmem:[%s1 + $0x1e8] sm:$0xff]
        %v457 = vld [vmem:[%s1 + $0x1f0] sm:$0xff]
        %v458 = vld [vmem:[%s1 + $0x1f8] sm:$0xff]
        %v459 = vld [vmem:[%s1 + $0x200] sm:$0xff]
        %v460 = vld [vmem:[%s1 + $0x208] sm:$0xff]
        %v461 = vld [vmem:[%s1 + $0x210] sm:$0xff]
        %v462 = vld [vmem:[%s1 + $0x218] sm:$0xff]
        %v463 = vld [vmem:[%s1 + $0x220] sm:$0xff]
        %v464 = vld [vmem:[%s1 + $0x228] sm:$0xff]
        %v465 = vld [vmem:[%s1 + $0x230] sm:$0xff]
        %v466 = vld [vmem:[%s1 + $0x238] sm:$0xff]
        %v467 = vld [vmem:[%s1 + $0x240] sm:$0xff]
        %v468 = vld [vmem:[%s1 + $0x248] sm:$0xff]
        %v469 = vld [vmem:[%s1 + $0x250] sm:$0xff]
        %v470 = vld [vmem:[%s1 + $0x258] sm:$0xff]
        %v471 = vld [vmem:[%s1 + $0x260] sm:$0xff]
        %v472 = vld [vmem:[%s1 + $0x268] sm:$0xff]
        %v473 = vld [vmem:[%s1 + $0x270] sm:$0xff]
        %v474 = vld [vmem:[%s1 + $0x278] sm:$0xff]
        %v475 = vld [vmem:[%s1 + $0x280] sm:$0xff]
        %v476 = vld [vmem:[%s1 + $0x288] sm:$0xff]
        %v477 = vld [vmem:[%s1 + $0x290] sm:$0xff]
        %v478 = vld [vmem:[%s1 + $0x298] sm:$0xff]
        %v479 = vld [vmem:[%s1 + $0x2a0] sm:$0xff]
        %v480 = vld [vmem:[%s1 + $0x2a8] sm:$0xff]
        %v481 = vld [vmem:[%s1 + $0x2b0] sm:$0xff]
        %v482 = vld [vmem:[%s1 + $0x2b8] sm:$0xff]
        %v483 = vld [vmem:[%s1 + $0x2c0] sm:$0xff]
        %v484 = vld [vmem:[%s1 + $0x2c8] sm:$0xff]
        %v485 = vld [vmem:[%s1 + $0x2d0] sm:$0xff]
        %v486 = vld [vmem:[%s1 + $0x2d8] sm:$0xff]
        %v487 = vld [vmem:[%s1 + $0x2e0] sm:$0xff]
        %v488 = vld [vmem:[%s1 + $0x2e8] sm:$0xff]
        %v489 = vld [vmem:[%s1 + $0x2f0] sm:$0xff]
        %v490 = vld [vmem:[%s1 + $0x2f8] sm:$0xff]
        %v491 = vld [vmem:[%s1 + $0x300] sm:$0xff]
        %v492 = vld [vmem:[%s1 + $0x308] sm:$0xff]
        %v493 = vld [vmem:[%s2] sm:$0x1]
        %v495 = vlaneseq
        %v496 = vshrl.u32 %v495, 7
        %v497 = vsub.s32 0, %v496
        %v498 = vrot.slane %v493, %v497
        %vm500 = vcmask 130048
        %v502 = vsel %vm500, %v289, 0
        %v505 = vsel %vm500, %v296, 0
        %v508 = vsel %vm500, %v303, 0
        %v511 = vsel %vm500, %v310, 0
        %v514 = vsel %vm500, %v317, 0
        %v517 = vsel %vm500, %v324, 0
        %v520 = vsel %vm500, %v331, 0
        %v523 = vsel %vm500, %v338, 0
        %v526 = vsel %vm500, %v345, 0
        %v529 = vsel %vm500, %v352, 0
        %v532 = vsel %vm500, %v359, 0
        %v535 = vsel %vm500, %v366, 0
        %v538 = vsel %vm500, %v373, 0
        %v541 = vsel %vm500, %v380, 0
        %v544 = vsel %vm500, %v387, 0
        %v547 = vsel %vm500, %v394, 0
        %549 = vmatprep.subr.mxu0 0.0
        %550 = vmatpush1.msra.mxu0 %v410
        %551 = vmatprep.subr.mxu0 0.0
        %552 = vmatpush1.msra.mxu0 %v409
        %553 = vmatprep.subr.mxu0 0.0
        %554 = vmatpush1.msra.mxu0 %v408
        %555 = vmatprep.subr.mxu0 0.0
        %556 = vmatpush1.msra.mxu0 %v407
        %557 = vmatprep.subr.mxu0 0.0
        %558 = vmatpush1.msra.mxu0 %v406
        %559 = vmatprep.subr.mxu0 0.0
        %560 = vmatpush1.msra.mxu0 %v405
        %561 = vmatprep.subr.mxu0 0.0
        %562 = vmatpush1.msra.mxu0 %v404
        %563 = vmatprep.subr.mxu0 0.0
        %564 = vmatpush1.msra.mxu0 %v403
        %565 = vmatprep.subr.mxu0 0.0
        %566 = vmatpush1.msra.mxu0 %v402
        %567 = vmatprep.subr.mxu0 0.0
        %568 = vmatpush1.msra.mxu0 %v401
        %569 = vmatprep.subr.mxu0 0.0
        %570 = vmatpush1.msra.mxu0 %v400
        %571 = vmatprep.subr.mxu0 0.0
        %572 = vmatpush1.msra.mxu0 %v399
        %573 = vmatprep.subr.mxu0 0.0
        %574 = vmatpush1.msra.mxu0 %v398
        %575 = vmatprep.subr.mxu0 0.0
        %576 = vmatpush1.msra.mxu0 %v397
        %577 = vmatprep.subr.mxu0 0.0
        %578 = vmatpush1.msra.mxu0 %v396
        %579 = vmatprep.subr.mxu0 0.0
        %580 = vmatpush1.msra.mxu0 %v395
        %581 = vmatprep.subr.mxu0 0.0
        %582 = vmatpush2.msra.mxu0 %v426
        %583 = vmatprep.subr.mxu0 0.0
        %584 = vmatpush2.msra.mxu0 %v425
        %585 = vmatprep.subr.mxu0 0.0
        %586 = vmatpush2.msra.mxu0 %v424
        %587 = vmatprep.subr.mxu0 0.0
        %588 = vmatpush2.msra.mxu0 %v423
        %589 = vmatprep.subr.mxu0 0.0
        %590 = vmatpush2.msra.mxu0 %v422
        %591 = vmatprep.subr.mxu0 0.0
        %592 = vmatpush2.msra.mxu0 %v421
        %593 = vmatprep.subr.mxu0 0.0
        %594 = vmatpush2.msra.mxu0 %v420
        %595 = vmatprep.subr.mxu0 0.0
        %596 = vmatpush2.msra.mxu0 %v419
        %597 = vmatprep.subr.mxu0 0.0
        %598 = vmatpush2.msra.mxu0 %v418
        %599 = vmatprep.subr.mxu0 0.0
        %600 = vmatpush2.msra.mxu0 %v417
        %601 = vmatprep.subr.mxu0 0.0
        %602 = vmatpush2.msra.mxu0 %v416
        %603 = vmatprep.subr.mxu0 0.0
        %604 = vmatpush2.msra.mxu0 %v415
        %605 = vmatprep.subr.mxu0 0.0
        %606 = vmatpush2.msra.mxu0 %v414
        %607 = vmatprep.subr.mxu0 0.0
        %608 = vmatpush2.msra.mxu0 %v413
        %609 = vmatprep.subr.mxu0 0.0
        %610 = vmatpush2.msra.mxu0 %v412
        %611 = vmatprep.subr.mxu0 0.0
        %612 = vmatpush2.msra.mxu0 %v411
        %613 = vmatprep.mubr.f32.mxu0 %v284
        %614 = vmatmul.mubr.f32.gmra.mxu0 %v283
        %v615 = vpop.f32.mrf.mxu0
        %v616 = vadd.f32 %v498, %v615
        %v617 = vpop.f32.mrf.mxu0
        %618 = vmatprep.mubr.f32.mxu0 %v291
        %619 = vmatmul.mubr.f32.gmra.mxu0 %v290
        %v620 = vpop.f32.mrf.mxu0
        %v621 = vadd.f32 %v498, %v620
        %v622 = vpop.f32.mrf.mxu0
        %623 = vmatprep.mubr.f32.mxu0 %v298
        %624 = vmatmul.mubr.f32.gmra.mxu0 %v297
        %v625 = vpop.f32.mrf.mxu0
        %v626 = vadd.f32 %v498, %v625
        %v627 = vpop.f32.mrf.mxu0
        %628 = vmatprep.mubr.f32.mxu0 %v305
        %629 = vmatmul.mubr.f32.gmra.mxu0 %v304
        %v630 = vpop.f32.mrf.mxu0
        %v631 = vadd.f32 %v498, %v630
        %v632 = vpop.f32.mrf.mxu0
        %633 = vmatprep.mubr.f32.mxu0 %v312
        %634 = vmatmul.mubr.f32.gmra.mxu0 %v311
        %v635 = vpop.f32.mrf.mxu0
        %v636 = vadd.f32 %v498, %v635
        %v637 = vpop.f32.mrf.mxu0
        %638 = vmatprep.mubr.f32.mxu0 %v319
        %639 = vmatmul.mubr.f32.gmra.mxu0 %v318
        %v640 = vpop.f32.mrf.mxu0
        %v641 = vadd.f32 %v498, %v640
        %v642 = vpop.f32.mrf.mxu0
        %643 = vmatprep.mubr.f32.mxu0 %v326
        %644 = vmatmul.mubr.f32.gmra.mxu0 %v325
        %v645 = vpop.f32.mrf.mxu0
        %v646 = vadd.f32 %v498, %v645
        %v647 = vpop.f32.mrf.mxu0
        %648 = vmatprep.mubr.f32.mxu0 %v333
        %649 = vmatmul.mubr.f32.gmra.mxu0 %v332
        %v650 = vpop.f32.mrf.mxu0
        %v651 = vadd.f32 %v498, %v650
        %v652 = vpop.f32.mrf.mxu0
        %653 = vmatprep.mubr.f32.mxu0 %v340
        %654 = vmatmul.mubr.f32.gmra.mxu0 %v339
        %v655 = vpop.f32.mrf.mxu0
        %v656 = vadd.f32 %v498, %v655
        %v657 = vpop.f32.mrf.mxu0
        %658 = vmatprep.mubr.f32.mxu0 %v347
        %659 = vmatmul.mubr.f32.gmra.mxu0 %v346
        %v660 = vpop.f32.mrf.mxu0
        %v661 = vadd.f32 %v498, %v660
        %v662 = vpop.f32.mrf.mxu0
        %663 = vmatprep.mubr.f32.mxu0 %v354
        %664 = vmatmul.mubr.f32.gmra.mxu0 %v353
        %v665 = vpop.f32.mrf.mxu0
        %v666 = vadd.f32 %v498, %v665
        %v667 = vpop.f32.mrf.mxu0
        %668 = vmatprep.mubr.f32.mxu0 %v361
        %669 = vmatmul.mubr.f32.gmra.mxu0 %v360
        %v670 = vpop.f32.mrf.mxu0
        %v671 = vadd.f32 %v498, %v670
        %v672 = vpop.f32.mrf.mxu0
        %673 = vmatprep.mubr.f32.mxu0 %v368
        %674 = vmatmul.mubr.f32.gmra.mxu0 %v367
        %v675 = vpop.f32.mrf.mxu0
        %v676 = vadd.f32 %v498, %v675
        %v677 = vpop.f32.mrf.mxu0
        %678 = vmatprep.mubr.f32.mxu0 %v375
        %679 = vmatmul.mubr.f32.gmra.mxu0 %v374
        %v680 = vpop.f32.mrf.mxu0
        %v681 = vadd.f32 %v498, %v680
        %v682 = vpop.f32.mrf.mxu0
        %683 = vmatprep.mubr.f32.mxu0 %v382
        %684 = vmatmul.mubr.f32.gmra.mxu0 %v381
        %v685 = vpop.f32.mrf.mxu0
        %v686 = vadd.f32 %v498, %v685
        %v687 = vpop.f32.mrf.mxu0
        %688 = vmatprep.mubr.f32.mxu0 %v389
        %689 = vmatmul.mubr.f32.gmra.mxu0 %v388
        %v690 = vpop.f32.mrf.mxu0
        %v691 = vadd.f32 %v498, %v690
        %v692 = vpop.f32.mrf.mxu0
        %693 = vdwg.mxu0
        %694 = vmatprep.subr.mxu0 0.0
        %695 = vmatpush1.msra.mxu0 %v442
        %696 = vmatprep.subr.mxu0 0.0
        %697 = vmatpush1.msra.mxu0 %v441
        %698 = vmatprep.subr.mxu0 0.0
        %699 = vmatpush1.msra.mxu0 %v440
        %700 = vmatprep.subr.mxu0 0.0
        %701 = vmatpush1.msra.mxu0 %v439
        %702 = vmatprep.subr.mxu0 0.0
        %703 = vmatpush1.msra.mxu0 %v438
        %704 = vmatprep.subr.mxu0 0.0
        %705 = vmatpush1.msra.mxu0 %v437
        %706 = vmatprep.subr.mxu0 0.0
        %707 = vmatpush1.msra.mxu0 %v436
        %708 = vmatprep.subr.mxu0 0.0
        %709 = vmatpush1.msra.mxu0 %v435
        %710 = vmatprep.subr.mxu0 0.0
        %711 = vmatpush1.msra.mxu0 %v434
        %712 = vmatprep.subr.mxu0 0.0
        %713 = vmatpush1.msra.mxu0 %v433
        %714 = vmatprep.subr.mxu0 0.0
        %715 = vmatpush1.msra.mxu0 %v432
        %716 = vmatprep.subr.mxu0 0.0
        %717 = vmatpush1.msra.mxu0 %v431
        %718 = vmatprep.subr.mxu0 0.0
        %719 = vmatpush1.msra.mxu0 %v430
        %720 = vmatprep.subr.mxu0 0.0
        %721 = vmatpush1.msra.mxu0 %v429
        %722 = vmatprep.subr.mxu0 0.0
        %723 = vmatpush1.msra.mxu0 %v428
        %724 = vmatprep.subr.mxu0 0.0
        %725 = vmatpush1.msra.mxu0 %v427
        %726 = vmatprep.subr.mxu0 0.0
        %727 = vmatpush2.msra.mxu0 %v458
        %728 = vmatprep.subr.mxu0 0.0
        %729 = vmatpush2.msra.mxu0 %v457
        %730 = vmatprep.subr.mxu0 0.0
        %731 = vmatpush2.msra.mxu0 %v456
        %732 = vmatprep.subr.mxu0 0.0
        %733 = vmatpush2.msra.mxu0 %v455
        %734 = vmatprep.subr.mxu0 0.0
        %735 = vmatpush2.msra.mxu0 %v454
        %736 = vmatprep.subr.mxu0 0.0
        %737 = vmatpush2.msra.mxu0 %v453
        %738 = vmatprep.subr.mxu0 0.0
        %739 = vmatpush2.msra.mxu0 %v452
        %740 = vmatprep.subr.mxu0 0.0
        %741 = vmatpush2.msra.mxu0 %v451
        %742 = vmatprep.subr.mxu0 0.0
        %743 = vmatpush2.msra.mxu0 %v450
        %744 = vmatprep.subr.mxu0 0.0
        %745 = vmatpush2.msra.mxu0 %v449
        %746 = vmatprep.subr.mxu0 0.0
        %747 = vmatpush2.msra.mxu0 %v448
        %748 = vmatprep.subr.mxu0 0.0
        %749 = vmatpush2.msra.mxu0 %v447
        %750 = vmatprep.subr.mxu0 0.0
        %751 = vmatpush2.msra.mxu0 %v446
        %752 = vmatprep.subr.mxu0 0.0
        %753 = vmatpush2.msra.mxu0 %v445
        %754 = vmatprep.subr.mxu0 0.0
        %755 = vmatpush2.msra.mxu0 %v444
        %756 = vmatprep.subr.mxu0 0.0
        %757 = vmatpush2.msra.mxu0 %v443
        %758 = vmatprep.mubr.f32.mxu0 %v286
        %759 = vmatmul.mubr.f32.gmra.mxu0 %v285
        %v760 = vpop.f32.mrf.mxu0
        %v761 = vadd.f32 %v616, %v760
        %v762 = vpop.f32.mrf.mxu0
        %763 = vmatprep.mubr.f32.mxu0 %v293
        %764 = vmatmul.mubr.f32.gmra.mxu0 %v292
        %v765 = vpop.f32.mrf.mxu0
        %v766 = vadd.f32 %v621, %v765
        %v767 = vpop.f32.mrf.mxu0
        %768 = vmatprep.mubr.f32.mxu0 %v300
        %769 = vmatmul.mubr.f32.gmra.mxu0 %v299
        %v770 = vpop.f32.mrf.mxu0
        %v771 = vadd.f32 %v626, %v770
        %v772 = vpop.f32.mrf.mxu0
        %773 = vmatprep.mubr.f32.mxu0 %v307
        %774 = vmatmul.mubr.f32.gmra.mxu0 %v306
        %v775 = vpop.f32.mrf.mxu0
        %v776 = vadd.f32 %v631, %v775
        %v777 = vpop.f32.mrf.mxu0
        %778 = vmatprep.mubr.f32.mxu0 %v314
        %779 = vmatmul.mubr.f32.gmra.mxu0 %v313
        %v780 = vpop.f32.mrf.mxu0
        %v781 = vadd.f32 %v636, %v780
        %v782 = vpop.f32.mrf.mxu0
        %783 = vmatprep.mubr.f32.mxu0 %v321
        %784 = vmatmul.mubr.f32.gmra.mxu0 %v320
        %v785 = vpop.f32.mrf.mxu0
        %v786 = vadd.f32 %v641, %v785
        %v787 = vpop.f32.mrf.mxu0
        %788 = vmatprep.mubr.f32.mxu0 %v328
        %789 = vmatmul.mubr.f32.gmra.mxu0 %v327
        %v790 = vpop.f32.mrf.mxu0
        %v791 = vadd.f32 %v646, %v790
        %v792 = vpop.f32.mrf.mxu0
        %793 = vmatprep.mubr.f32.mxu0 %v335
        %794 = vmatmul.mubr.f32.gmra.mxu0 %v334
        %v795 = vpop.f32.mrf.mxu0
        %v796 = vadd.f32 %v651, %v795
        %v797 = vpop.f32.mrf.mxu0
        %798 = vmatprep.mubr.f32.mxu0 %v342
        %799 = vmatmul.mubr.f32.gmra.mxu0 %v341
        %v800 = vpop.f32.mrf.mxu0
        %v801 = vadd.f32 %v656, %v800
        %v802 = vpop.f32.mrf.mxu0
        %803 = vmatprep.mubr.f32.mxu0 %v349
        %804 = vmatmul.mubr.f32.gmra.mxu0 %v348
        %v805 = vpop.f32.mrf.mxu0
        %v806 = vadd.f32 %v661, %v805
        %v807 = vpop.f32.mrf.mxu0
        %808 = vmatprep.mubr.f32.mxu0 %v356
        %809 = vmatmul.mubr.f32.gmra.mxu0 %v355
        %v810 = vpop.f32.mrf.mxu0
        %v811 = vadd.f32 %v666, %v810
        %v812 = vpop.f32.mrf.mxu0
        %813 = vmatprep.mubr.f32.mxu0 %v363
        %814 = vmatmul.mubr.f32.gmra.mxu0 %v362
        %v815 = vpop.f32.mrf.mxu0
        %v816 = vadd.f32 %v671, %v815
        %v817 = vpop.f32.mrf.mxu0
        %818 = vmatprep.mubr.f32.mxu0 %v370
        %819 = vmatmul.mubr.f32.gmra.mxu0 %v369
        %v820 = vpop.f32.mrf.mxu0
        %v821 = vadd.f32 %v676, %v820
        %v822 = vpop.f32.mrf.mxu0
        %823 = vmatprep.mubr.f32.mxu0 %v377
        %824 = vmatmul.mubr.f32.gmra.mxu0 %v376
        %v825 = vpop.f32.mrf.mxu0
        %v826 = vadd.f32 %v681, %v825
        %v827 = vpop.f32.mrf.mxu0
        %828 = vmatprep.mubr.f32.mxu0 %v384
        %829 = vmatmul.mubr.f32.gmra.mxu0 %v383
        %v830 = vpop.f32.mrf.mxu0
        %v831 = vadd.f32 %v686, %v830
        %v832 = vpop.f32.mrf.mxu0
        %833 = vmatprep.mubr.f32.mxu0 %v391
        %834 = vmatmul.mubr.f32.gmra.mxu0 %v390
        %v835 = vpop.f32.mrf.mxu0
        %v836 = vadd.f32 %v691, %v835
        %v837 = vpop.f32.mrf.mxu0
        %838 = vdwg.mxu0
        %839 = vmatprep.subr.mxu0 0.0
        %840 = vmatpush1.msra.mxu0 %v474
        %841 = vmatprep.subr.mxu0 0.0
        %842 = vmatpush1.msra.mxu0 %v473
        %843 = vmatprep.subr.mxu0 0.0
        %844 = vmatpush1.msra.mxu0 %v472
        %845 = vmatprep.subr.mxu0 0.0
        %846 = vmatpush1.msra.mxu0 %v471
        %847 = vmatprep.subr.mxu0 0.0
        %848 = vmatpush1.msra.mxu0 %v470
        %849 = vmatprep.subr.mxu0 0.0
        %850 = vmatpush1.msra.mxu0 %v469
        %851 = vmatprep.subr.mxu0 0.0
        %852 = vmatpush1.msra.mxu0 %v468
        %853 = vmatprep.subr.mxu0 0.0
        %854 = vmatpush1.msra.mxu0 %v467
        %855 = vmatprep.subr.mxu0 0.0
        %856 = vmatpush1.msra.mxu0 %v466
        %857 = vmatprep.subr.mxu0 0.0
        %858 = vmatpush1.msra.mxu0 %v465
        %859 = vmatprep.subr.mxu0 0.0
        %860 = vmatpush1.msra.mxu0 %v464
        %861 = vmatprep.subr.mxu0 0.0
        %862 = vmatpush1.msra.mxu0 %v463
        %863 = vmatprep.subr.mxu0 0.0
        %864 = vmatpush1.msra.mxu0 %v462
        %865 = vmatprep.subr.mxu0 0.0
        %866 = vmatpush1.msra.mxu0 %v461
        %867 = vmatprep.subr.mxu0 0.0
        %868 = vmatpush1.msra.mxu0 %v460
        %869 = vmatprep.subr.mxu0 0.0
        %870 = vmatpush1.msra.mxu0 %v459
        %871 = vmatprep.subr.mxu0 0.0
        %872 = vmatpush2.msra.mxu0 %v490
        %873 = vmatprep.subr.mxu0 0.0
        %874 = vmatpush2.msra.mxu0 %v489
        %875 = vmatprep.subr.mxu0 0.0
        %876 = vmatpush2.msra.mxu0 %v488
        %877 = vmatprep.subr.mxu0 0.0
        %878 = vmatpush2.msra.mxu0 %v487
        %879 = vmatprep.subr.mxu0 0.0
        %880 = vmatpush2.msra.mxu0 %v486
        %881 = vmatprep.subr.mxu0 0.0
        %882 = vmatpush2.msra.mxu0 %v485
        %883 = vmatprep.subr.mxu0 0.0
        %884 = vmatpush2.msra.mxu0 %v484
        %885 = vmatprep.subr.mxu0 0.0
        %886 = vmatpush2.msra.mxu0 %v483
        %887 = vmatprep.subr.mxu0 0.0
        %888 = vmatpush2.msra.mxu0 %v482
        %889 = vmatprep.subr.mxu0 0.0
        %890 = vmatpush2.msra.mxu0 %v481
        %891 = vmatprep.subr.mxu0 0.0
        %892 = vmatpush2.msra.mxu0 %v480
        %893 = vmatprep.subr.mxu0 0.0
        %894 = vmatpush2.msra.mxu0 %v479
        %895 = vmatprep.subr.mxu0 0.0
        %896 = vmatpush2.msra.mxu0 %v478
        %897 = vmatprep.subr.mxu0 0.0
        %898 = vmatpush2.msra.mxu0 %v477
        %899 = vmatprep.subr.mxu0 0.0
        %900 = vmatpush2.msra.mxu0 %v476
        %901 = vmatprep.subr.mxu0 0.0
        %902 = vmatpush2.msra.mxu0 %v475
        %903 = vmatprep.mubr.f32.mxu0 %v288
        %904 = vmatmul.mubr.f32.gmra.mxu0 %v287
        %v905 = vpop.f32.mrf.mxu0
        %v906 = vadd.f32 %v761, %v905
        %v907 = vpop.f32.mrf.mxu0
        %908 = vmatprep.mubr.f32.mxu0 %v295
        %909 = vmatmul.mubr.f32.gmra.mxu0 %v294
        %v910 = vpop.f32.mrf.mxu0
        %v911 = vadd.f32 %v766, %v910
        %v912 = vpop.f32.mrf.mxu0
        %913 = vmatprep.mubr.f32.mxu0 %v302
        %914 = vmatmul.mubr.f32.gmra.mxu0 %v301
        %v915 = vpop.f32.mrf.mxu0
        %v916 = vadd.f32 %v771, %v915
        %v917 = vpop.f32.mrf.mxu0
        %918 = vmatprep.mubr.f32.mxu0 %v309
        %919 = vmatmul.mubr.f32.gmra.mxu0 %v308
        %v920 = vpop.f32.mrf.mxu0
        %v921 = vadd.f32 %v776, %v920
        %v922 = vpop.f32.mrf.mxu0
        %923 = vmatprep.mubr.f32.mxu0 %v316
        %924 = vmatmul.mubr.f32.gmra.mxu0 %v315
        %v925 = vpop.f32.mrf.mxu0
        %v926 = vadd.f32 %v781, %v925
        %v927 = vpop.f32.mrf.mxu0
        %928 = vmatprep.mubr.f32.mxu0 %v323
        %929 = vmatmul.mubr.f32.gmra.mxu0 %v322
        %v930 = vpop.f32.mrf.mxu0
        %v931 = vadd.f32 %v786, %v930
        %v932 = vpop.f32.mrf.mxu0
        %933 = vmatprep.mubr.f32.mxu0 %v330
        %934 = vmatmul.mubr.f32.gmra.mxu0 %v329
        %v935 = vpop.f32.mrf.mxu0
        %v936 = vadd.f32 %v791, %v935
        %v937 = vpop.f32.mrf.mxu0
        %938 = vmatprep.mubr.f32.mxu0 %v337
        %939 = vmatmul.mubr.f32.gmra.mxu0 %v336
        %v940 = vpop.f32.mrf.mxu0
        %v941 = vadd.f32 %v796, %v940
        %v942 = vpop.f32.mrf.mxu0
        %943 = vmatprep.mubr.f32.mxu0 %v344
        %944 = vmatmul.mubr.f32.gmra.mxu0 %v343
        %v945 = vpop.f32.mrf.mxu0
        %v946 = vadd.f32 %v801, %v945
        %v947 = vpop.f32.mrf.mxu0
        %948 = vmatprep.mubr.f32.mxu0 %v351
        %949 = vmatmul.mubr.f32.gmra.mxu0 %v350
        %v950 = vpop.f32.mrf.mxu0
        %v951 = vadd.f32 %v806, %v950
        %v952 = vpop.f32.mrf.mxu0
        %953 = vmatprep.mubr.f32.mxu0 %v358
        %954 = vmatmul.mubr.f32.gmra.mxu0 %v357
        %v955 = vpop.f32.mrf.mxu0
        %v956 = vadd.f32 %v811, %v955
        %v957 = vpop.f32.mrf.mxu0
        %958 = vmatprep.mubr.f32.mxu0 %v365
        %959 = vmatmul.mubr.f32.gmra.mxu0 %v364
        %v960 = vpop.f32.mrf.mxu0
        %v961 = vadd.f32 %v816, %v960
        %v962 = vpop.f32.mrf.mxu0
        %963 = vmatprep.mubr.f32.mxu0 %v372
        %964 = vmatmul.mubr.f32.gmra.mxu0 %v371
        %v965 = vpop.f32.mrf.mxu0
        %v966 = vadd.f32 %v821, %v965
        %v967 = vpop.f32.mrf.mxu0
        %968 = vmatprep.mubr.f32.mxu0 %v379
        %969 = vmatmul.mubr.f32.gmra.mxu0 %v378
        %v970 = vpop.f32.mrf.mxu0
        %v971 = vadd.f32 %v826, %v970
        %v972 = vpop.f32.mrf.mxu0
        %973 = vmatprep.mubr.f32.mxu0 %v386
        %974 = vmatmul.mubr.f32.gmra.mxu0 %v385
        %v975 = vpop.f32.mrf.mxu0
        %v976 = vadd.f32 %v831, %v975
        %v977 = vpop.f32.mrf.mxu0
        %978 = vmatprep.mubr.f32.mxu0 %v393
        %979 = vmatmul.mubr.f32.gmra.mxu0 %v392
        %v980 = vpop.f32.mrf.mxu0
        %v981 = vadd.f32 %v836, %v980
        %v982 = vpop.f32.mrf.mxu0
        %983 = vdwg.mxu0
        %984 = vmatprep.subr.mxu0 0.0
        %985 = vmatpush1.msra.mxu0 0.0
        %986 = vmatprep.subr.mxu0 0.0
        %987 = vmatpush1.msra.mxu0 0.0
        %988 = vmatprep.subr.mxu0 0.0
        %989 = vmatpush1.msra.mxu0 0.0
        %990 = vmatprep.subr.mxu0 0.0
        %991 = vmatpush1.msra.mxu0 0.0
        %992 = vmatprep.subr.mxu0 0.0
        %993 = vmatpush1.msra.mxu0 0.0
        %994 = vmatprep.subr.mxu0 0.0
        %995 = vmatpush1.msra.mxu0 0.0
        %996 = vmatprep.subr.mxu0 0.0
        %997 = vmatpush1.msra.mxu0 0.0
        %998 = vmatprep.subr.mxu0 0.0
        %999 = vmatpush1.msra.mxu0 0.0
        %1000 = vmatprep.subr.mxu0 0.0
        %1001 = vmatpush1.msra.mxu0 0.0
        %1002 = vmatprep.subr.mxu0 0.0
        %1003 = vmatpush1.msra.mxu0 0.0
        %1004 = vmatprep.subr.mxu0 0.0
        %1005 = vmatpush1.msra.mxu0 0.0
        %1006 = vmatprep.subr.mxu0 0.0
        %1007 = vmatpush1.msra.mxu0 0.0
        %1008 = vmatprep.subr.mxu0 0.0
        %1009 = vmatpush1.msra.mxu0 0.0
        %1010 = vmatprep.subr.mxu0 0.0
        %1011 = vmatpush1.msra.mxu0 0.0
        %1012 = vmatprep.subr.mxu0 0.0
        %1013 = vmatpush1.msra.mxu0 %v492
        %1014 = vmatprep.subr.mxu0 0.0
        %1015 = vmatpush1.msra.mxu0 %v491
        %1016 = vmatprep.subr.mxu0 0.0
        %1017 = vmatpush2.msra.mxu0 0.0
        %1018 = vmatprep.subr.mxu0 0.0
        %1019 = vmatpush2.msra.mxu0 0.0
        %1020 = vmatprep.subr.mxu0 0.0
        %1021 = vmatpush2.msra.mxu0 0.0
        %1022 = vmatprep.subr.mxu0 0.0
        %1023 = vmatpush2.msra.mxu0 0.0
        %1024 = vmatprep.subr.mxu0 0.0
        %1025 = vmatpush2.msra.mxu0 0.0
        %1026 = vmatprep.subr.mxu0 0.0
        %1027 = vmatpush2.msra.mxu0 0.0
        %1028 = vmatprep.subr.mxu0 0.0
        %1029 = vmatpush2.msra.mxu0 0.0
        %1030 = vmatprep.subr.mxu0 0.0
        %1031 = vmatpush2.msra.mxu0 0.0
        %1032 = vmatprep.subr.mxu0 0.0
        %1033 = vmatpush2.msra.mxu0 0.0
        %1034 = vmatprep.subr.mxu0 0.0
        %1035 = vmatpush2.msra.mxu0 0.0
        %1036 = vmatprep.subr.mxu0 0.0
        %1037 = vmatpush2.msra.mxu0 0.0
        %1038 = vmatprep.subr.mxu0 0.0
        %1039 = vmatpush2.msra.mxu0 0.0
        %1040 = vmatprep.subr.mxu0 0.0
        %1041 = vmatpush2.msra.mxu0 0.0
        %1042 = vmatprep.subr.mxu0 0.0
        %1043 = vmatpush2.msra.mxu0 0.0
        %1044 = vmatprep.subr.mxu0 0.0
        %1045 = vmatpush2.msra.mxu0 0.0
        %1046 = vmatprep.subr.mxu0 0.0
        %1047 = vmatpush2.msra.mxu0 0.0
        %1048 = vmatprep.mubr.f32.mxu0 0.0
        %1049 = vmatmul.mubr.f32.gmra.mxu0 %v502
        %v1050 = vpop.f32.mrf.mxu0
        %v1051 = vadd.f32 %v906, %v1050
        %v1052 = vpop.f32.mrf.mxu0
        %1053 = vmatprep.mubr.f32.mxu0 0.0
        %1054 = vmatmul.mubr.f32.gmra.mxu0 %v505
        %v1055 = vpop.f32.mrf.mxu0
        %v1056 = vadd.f32 %v911, %v1055
        %v1057 = vpop.f32.mrf.mxu0
        %1058 = vmatprep.mubr.f32.mxu0 0.0
        %1059 = vmatmul.mubr.f32.gmra.mxu0 %v508
        %v1060 = vpop.f32.mrf.mxu0
        %v1061 = vadd.f32 %v916, %v1060
        %v1062 = vpop.f32.mrf.mxu0
        %1063 = vmatprep.mubr.f32.mxu0 0.0
        %1064 = vmatmul.mubr.f32.gmra.mxu0 %v511
        %v1065 = vpop.f32.mrf.mxu0
        %v1066 = vadd.f32 %v921, %v1065
        %v1067 = vpop.f32.mrf.mxu0
        %1068 = vmatprep.mubr.f32.mxu0 0.0
        %1069 = vmatmul.mubr.f32.gmra.mxu0 %v514
        %v1070 = vpop.f32.mrf.mxu0
        %v1071 = vadd.f32 %v926, %v1070
        %v1072 = vpop.f32.mrf.mxu0
        %1073 = vmatprep.mubr.f32.mxu0 0.0
        %1074 = vmatmul.mubr.f32.gmra.mxu0 %v517
        %v1075 = vpop.f32.mrf.mxu0
        %v1076 = vadd.f32 %v931, %v1075
        %v1077 = vpop.f32.mrf.mxu0
        %1078 = vmatprep.mubr.f32.mxu0 0.0
        %1079 = vmatmul.mubr.f32.gmra.mxu0 %v520
        %v1080 = vpop.f32.mrf.mxu0
        %v1081 = vadd.f32 %v936, %v1080
        %v1082 = vpop.f32.mrf.mxu0
        %1083 = vmatprep.mubr.f32.mxu0 0.0
        %1084 = vmatmul.mubr.f32.gmra.mxu0 %v523
        %v1085 = vpop.f32.mrf.mxu0
        %v1086 = vadd.f32 %v941, %v1085
        %v1087 = vpop.f32.mrf.mxu0
        %1088 = vmatprep.mubr.f32.mxu0 0.0
        %1089 = vmatmul.mubr.f32.gmra.mxu0 %v526
        %v1090 = vpop.f32.mrf.mxu0
        %v1091 = vadd.f32 %v946, %v1090
        %v1092 = vpop.f32.mrf.mxu0
        %1093 = vmatprep.mubr.f32.mxu0 0.0
        %1094 = vmatmul.mubr.f32.gmra.mxu0 %v529
        %v1095 = vpop.f32.mrf.mxu0
        %v1096 = vadd.f32 %v951, %v1095
        %v1097 = vpop.f32.mrf.mxu0
        %1098 = vmatprep.mubr.f32.mxu0 0.0
        %1099 = vmatmul.mubr.f32.gmra.mxu0 %v532
        %v1100 = vpop.f32.mrf.mxu0
        %v1101 = vadd.f32 %v956, %v1100
        %v1102 = vpop.f32.mrf.mxu0
        %1103 = vmatprep.mubr.f32.mxu0 0.0
        %1104 = vmatmul.mubr.f32.gmra.mxu0 %v535
        %v1105 = vpop.f32.mrf.mxu0
        %v1106 = vadd.f32 %v961, %v1105
        %v1107 = vpop.f32.mrf.mxu0
        %1108 = vmatprep.mubr.f32.mxu0 0.0
        %1109 = vmatmul.mubr.f32.gmra.mxu0 %v538
        %v1110 = vpop.f32.mrf.mxu0
        %v1111 = vadd.f32 %v966, %v1110
        %v1112 = vpop.f32.mrf.mxu0
        %1113 = vmatprep.mubr.f32.mxu0 0.0
        %1114 = vmatmul.mubr.f32.gmra.mxu0 %v541
        %v1115 = vpop.f32.mrf.mxu0
        %v1116 = vadd.f32 %v971, %v1115
        %v1117 = vpop.f32.mrf.mxu0
        %1118 = vmatprep.mubr.f32.mxu0 0.0
        %1119 = vmatmul.mubr.f32.gmra.mxu0 %v544
        %v1120 = vpop.f32.mrf.mxu0
        %v1121 = vadd.f32 %v976, %v1120
        %v1122 = vpop.f32.mrf.mxu0
        %1123 = vmatprep.mubr.f32.mxu0 0.0
        %1124 = vmatmul.mubr.f32.gmra.mxu0 %v547
        %v1125 = vpop.f32.mrf.mxu0
        %v1126 = vadd.f32 %v981, %v1125
        %v1127 = vpop.f32.mrf.mxu0
        %1128 = vdwg.mxu0
        %v1129 = vmax.f32 %v1051, 0.0
        %v1130 = vmax.f32 %v1056, 0.0
        %v1131 = vmax.f32 %v1061, 0.0
        %v1132 = vmax.f32 %v1066, 0.0
        %v1133 = vmax.f32 %v1071, 0.0
        %v1134 = vmax.f32 %v1076, 0.0
        %v1135 = vmax.f32 %v1081, 0.0
        %v1136 = vmax.f32 %v1086, 0.0
        %v1137 = vmax.f32 %v1091, 0.0
        %v1138 = vmax.f32 %v1096, 0.0
        %v1139 = vmax.f32 %v1101, 0.0
        %v1140 = vmax.f32 %v1106, 0.0
        %v1141 = vmax.f32 %v1111, 0.0
        %v1142 = vmax.f32 %v1116, 0.0
        %v1143 = vmax.f32 %v1121, 0.0
        %v1144 = vmax.f32 %v1126, 0.0
        %v1145 = vld [vmem:[%s3] sm:$0xff]
        %v1146 = vld [vmem:[%s3 + $0x8] sm:$0xff]
        %v1147 = vld [vmem:[%s3 + $0x10] sm:$0xff]
        %v1148 = vld [vmem:[%s3 + $0x18] sm:$0xff]
        %v1149 = vld [vmem:[%s3 + $0x20] sm:$0xff]
        %v1150 = vld [vmem:[%s3 + $0x28] sm:$0xff]
        %v1151 = vld [vmem:[%s3 + $0x30] sm:$0xff]
        %v1152 = vld [vmem:[%s3 + $0x38] sm:$0xff]
        %v1153 = vld [vmem:[%s3 + $0x40] sm:$0xff]
        %v1154 = vld [vmem:[%s3 + $0x48] sm:$0xff]
        %v1155 = vld [vmem:[%s3 + $0x50] sm:$0xff]
        %v1156 = vld [vmem:[%s3 + $0x58] sm:$0xff]
        %v1157 = vld [vmem:[%s3 + $0x60] sm:$0xff]
        %v1158 = vld [vmem:[%s3 + $0x68] sm:$0xff]
        %v1159 = vld [vmem:[%s3 + $0x70] sm:$0xff]
        %v1160 = vld [vmem:[%s3 + $0x78] sm:$0xff]
        %v1161 = vld [vmem:[%s4] sm:$0x1]
        %v1163 = vlaneseq
        %v1164 = vshrl.u32 %v1163, 7
        %v1165 = vsub.s32 0, %v1164
        %v1166 = vrot.slane %v1161, %v1165
        %1168 = vmatprep.subr.mxu0 0.0
        %1169 = vmatpush1.msra.mxu0 %v1160
        %1170 = vmatprep.subr.mxu0 0.0
        %1171 = vmatpush1.msra.mxu0 %v1159
        %1172 = vmatprep.subr.mxu0 0.0
        %1173 = vmatpush1.msra.mxu0 %v1158
        %1174 = vmatprep.subr.mxu0 0.0
        %1175 = vmatpush1.msra.mxu0 %v1157
        %1176 = vmatprep.subr.mxu0 0.0
        %1177 = vmatpush1.msra.mxu0 %v1156
        %1178 = vmatprep.subr.mxu0 0.0
        %1179 = vmatpush1.msra.mxu0 %v1155
        %1180 = vmatprep.subr.mxu0 0.0
        %1181 = vmatpush1.msra.mxu0 %v1154
        %1182 = vmatprep.subr.mxu0 0.0
        %1183 = vmatpush1.msra.mxu0 %v1153
        %1184 = vmatprep.subr.mxu0 0.0
        %1185 = vmatpush1.msra.mxu0 %v1152
        %1186 = vmatprep.subr.mxu0 0.0
        %1187 = vmatpush1.msra.mxu0 %v1151
        %1188 = vmatprep.subr.mxu0 0.0
        %1189 = vmatpush1.msra.mxu0 %v1150
        %1190 = vmatprep.subr.mxu0 0.0
        %1191 = vmatpush1.msra.mxu0 %v1149
        %1192 = vmatprep.subr.mxu0 0.0
        %1193 = vmatpush1.msra.mxu0 %v1148
        %1194 = vmatprep.subr.mxu0 0.0
        %1195 = vmatpush1.msra.mxu0 %v1147
        %1196 = vmatprep.subr.mxu0 0.0
        %1197 = vmatpush1.msra.mxu0 %v1146
        %1198 = vmatprep.subr.mxu0 0.0
        %1199 = vmatpush1.msra.mxu0 %v1145
        %1200 = vmatprep.subr.mxu0 0.0
        %1201 = vmatpush2.msra.mxu0 0.0
        %1202 = vmatprep.subr.mxu0 0.0
        %1203 = vmatpush2.msra.mxu0 0.0
        %1204 = vmatprep.subr.mxu0 0.0
        %1205 = vmatpush2.msra.mxu0 0.0
        %1206 = vmatprep.subr.mxu0 0.0
        %1207 = vmatpush2.msra.mxu0 0.0
        %1208 = vmatprep.subr.mxu0 0.0
        %1209 = vmatpush2.msra.mxu0 0.0
        %1210 = vmatprep.subr.mxu0 0.0
        %1211 = vmatpush2.msra.mxu0 0.0
        %1212 = vmatprep.subr.mxu0 0.0
        %1213 = vmatpush2.msra.mxu0 0.0
        %1214 = vmatprep.subr.mxu0 0.0
        %1215 = vmatpush2.msra.mxu0 0.0
        %1216 = vmatprep.subr.mxu0 0.0
        %1217 = vmatpush2.msra.mxu0 0.0
        %1218 = vmatprep.subr.mxu0 0.0
        %1219 = vmatpush2.msra.mxu0 0.0
        %1220 = vmatprep.subr.mxu0 0.0
        %1221 = vmatpush2.msra.mxu0 0.0
        %1222 = vmatprep.subr.mxu0 0.0
        %1223 = vmatpush2.msra.mxu0 0.0
        %1224 = vmatprep.subr.mxu0 0.0
        %1225 = vmatpush2.msra.mxu0 0.0
        %1226 = vmatprep.subr.mxu0 0.0
        %1227 = vmatpush2.msra.mxu0 0.0
        %1228 = vmatprep.subr.mxu0 0.0
        %1229 = vmatpush2.msra.mxu0 0.0
        %1230 = vmatprep.subr.mxu0 0.0
        %1231 = vmatpush2.msra.mxu0 0.0
        %1232 = vmatprep.mubr.f32.mxu0 0.0
        %1233 = vmatmul.mubr.f32.gmra.mxu0 %v1129
        %v1234 = vpop.f32.mrf.mxu0
        %v1235 = vadd.f32 %v1166, %v1234
        %v1236 = vpop.f32.mrf.mxu0
        %1237 = vmatprep.mubr.f32.mxu0 0.0
        %1238 = vmatmul.mubr.f32.gmra.mxu0 %v1130
        %v1239 = vpop.f32.mrf.mxu0
        %v1240 = vadd.f32 %v1166, %v1239
        %v1241 = vpop.f32.mrf.mxu0
        %1242 = vmatprep.mubr.f32.mxu0 0.0
        %1243 = vmatmul.mubr.f32.gmra.mxu0 %v1131
        %v1244 = vpop.f32.mrf.mxu0
        %v1245 = vadd.f32 %v1166, %v1244
        %v1246 = vpop.f32.mrf.mxu0
        %1247 = vmatprep.mubr.f32.mxu0 0.0
        %1248 = vmatmul.mubr.f32.gmra.mxu0 %v1132
        %v1249 = vpop.f32.mrf.mxu0
        %v1250 = vadd.f32 %v1166, %v1249
        %v1251 = vpop.f32.mrf.mxu0
        %1252 = vmatprep.mubr.f32.mxu0 0.0
        %1253 = vmatmul.mubr.f32.gmra.mxu0 %v1133
        %v1254 = vpop.f32.mrf.mxu0
        %v1255 = vadd.f32 %v1166, %v1254
        %v1256 = vpop.f32.mrf.mxu0
        %1257 = vmatprep.mubr.f32.mxu0 0.0
        %1258 = vmatmul.mubr.f32.gmra.mxu0 %v1134
        %v1259 = vpop.f32.mrf.mxu0
        %v1260 = vadd.f32 %v1166, %v1259
        %v1261 = vpop.f32.mrf.mxu0
        %1262 = vmatprep.mubr.f32.mxu0 0.0
        %1263 = vmatmul.mubr.f32.gmra.mxu0 %v1135
        %v1264 = vpop.f32.mrf.mxu0
        %v1265 = vadd.f32 %v1166, %v1264
        %v1266 = vpop.f32.mrf.mxu0
        %1267 = vmatprep.mubr.f32.mxu0 0.0
        %1268 = vmatmul.mubr.f32.gmra.mxu0 %v1136
        %v1269 = vpop.f32.mrf.mxu0
        %v1270 = vadd.f32 %v1166, %v1269
        %v1271 = vpop.f32.mrf.mxu0
        %1272 = vmatprep.mubr.f32.mxu0 0.0
        %1273 = vmatmul.mubr.f32.gmra.mxu0 %v1137
        %v1274 = vpop.f32.mrf.mxu0
        %v1275 = vadd.f32 %v1166, %v1274
        %v1276 = vpop.f32.mrf.mxu0
        %1277 = vmatprep.mubr.f32.mxu0 0.0
        %1278 = vmatmul.mubr.f32.gmra.mxu0 %v1138
        %v1279 = vpop.f32.mrf.mxu0
        %v1280 = vadd.f32 %v1166, %v1279
        %v1281 = vpop.f32.mrf.mxu0
        %1282 = vmatprep.mubr.f32.mxu0 0.0
        %1283 = vmatmul.mubr.f32.gmra.mxu0 %v1139
        %v1284 = vpop.f32.mrf.mxu0
        %v1285 = vadd.f32 %v1166, %v1284
        %v1286 = vpop.f32.mrf.mxu0
        %1287 = vmatprep.mubr.f32.mxu0 0.0
        %1288 = vmatmul.mubr.f32.gmra.mxu0 %v1140
        %v1289 = vpop.f32.mrf.mxu0
        %v1290 = vadd.f32 %v1166, %v1289
        %v1291 = vpop.f32.mrf.mxu0
        %1292 = vmatprep.mubr.f32.mxu0 0.0
        %1293 = vmatmul.mubr.f32.gmra.mxu0 %v1141
        %v1294 = vpop.f32.mrf.mxu0
        %v1295 = vadd.f32 %v1166, %v1294
        %v1296 = vpop.f32.mrf.mxu0
        %1297 = vmatprep.mubr.f32.mxu0 0.0
        %1298 = vmatmul.mubr.f32.gmra.mxu0 %v1142
        %v1299 = vpop.f32.mrf.mxu0
        %v1300 = vadd.f32 %v1166, %v1299
        %v1301 = vpop.f32.mrf.mxu0
        %1302 = vmatprep.mubr.f32.mxu0 0.0
        %1303 = vmatmul.mubr.f32.gmra.mxu0 %v1143
        %v1304 = vpop.f32.mrf.mxu0
        %v1305 = vadd.f32 %v1166, %v1304
        %v1306 = vpop.f32.mrf.mxu0
        %1307 = vmatprep.mubr.f32.mxu0 0.0
        %1308 = vmatmul.mubr.f32.gmra.mxu0 %v1144
        %v1309 = vpop.f32.mrf.mxu0
        %v1310 = vadd.f32 %v1166, %v1309
        %v1311 = vpop.f32.mrf.mxu0
        %1312 = vdwg.mxu0
        %v1313 = vmax.f32 %v1235, 0.0
        %v1314 = vmax.f32 %v1240, 0.0
        %v1315 = vmax.f32 %v1245, 0.0
        %v1316 = vmax.f32 %v1250, 0.0
        %v1317 = vmax.f32 %v1255, 0.0
        %v1318 = vmax.f32 %v1260, 0.0
        %v1319 = vmax.f32 %v1265, 0.0
        %v1320 = vmax.f32 %v1270, 0.0
        %v1321 = vmax.f32 %v1275, 0.0
        %v1322 = vmax.f32 %v1280, 0.0
        %v1323 = vmax.f32 %v1285, 0.0
        %v1324 = vmax.f32 %v1290, 0.0
        %v1325 = vmax.f32 %v1295, 0.0
        %v1326 = vmax.f32 %v1300, 0.0
        %v1327 = vmax.f32 %v1305, 0.0
        %v1328 = vmax.f32 %v1310, 0.0
        %v1329 = vld [vmem:[%s5] sm:$0xff]
        %v1330 = vld [vmem:[%s5 + $0x8] sm:$0xff]
        %v1331 = vld [vmem:[%s5 + $0x10] sm:$0xff]
        %v1332 = vld [vmem:[%s5 + $0x18] sm:$0xff]
        %v1333 = vld [vmem:[%s5 + $0x20] sm:$0xff]
        %v1334 = vld [vmem:[%s5 + $0x28] sm:$0xff]
        %v1335 = vld [vmem:[%s5 + $0x30] sm:$0xff]
        %v1336 = vld [vmem:[%s5 + $0x38] sm:$0xff]
        %v1337 = vld [vmem:[%s5 + $0x40] sm:$0xff]
        %v1338 = vld [vmem:[%s5 + $0x48] sm:$0xff]
        %v1339 = vld [vmem:[%s5 + $0x50] sm:$0xff]
        %v1340 = vld [vmem:[%s5 + $0x58] sm:$0xff]
        %v1341 = vld [vmem:[%s5 + $0x60] sm:$0xff]
        %v1342 = vld [vmem:[%s5 + $0x68] sm:$0xff]
        %v1343 = vld [vmem:[%s5 + $0x70] sm:$0xff]
        %v1344 = vld [vmem:[%s5 + $0x78] sm:$0xff]
        %v1345 = vld [vmem:[%s6] sm:$0x1]
        %v1347 = vlaneseq
        %v1348 = vshrl.u32 %v1347, 7
        %v1349 = vsub.s32 0, %v1348
        %v1350 = vrot.slane %v1345, %v1349
        %1352 = vmatprep.subr.mxu0 0.0
        %1353 = vmatpush1.msra.mxu0 %v1344
        %1354 = vmatprep.subr.mxu0 0.0
        %1355 = vmatpush1.msra.mxu0 %v1343
        %1356 = vmatprep.subr.mxu0 0.0
        %1357 = vmatpush1.msra.mxu0 %v1342
        %1358 = vmatprep.subr.mxu0 0.0
        %1359 = vmatpush1.msra.mxu0 %v1341
        %1360 = vmatprep.subr.mxu0 0.0
        %1361 = vmatpush1.msra.mxu0 %v1340
        %1362 = vmatprep.subr.mxu0 0.0
        %1363 = vmatpush1.msra.mxu0 %v1339
        %1364 = vmatprep.subr.mxu0 0.0
        %1365 = vmatpush1.msra.mxu0 %v1338
        %1366 = vmatprep.subr.mxu0 0.0
        %1367 = vmatpush1.msra.mxu0 %v1337
        %1368 = vmatprep.subr.mxu0 0.0
        %1369 = vmatpush1.msra.mxu0 %v1336
        %1370 = vmatprep.subr.mxu0 0.0
        %1371 = vmatpush1.msra.mxu0 %v1335
        %1372 = vmatprep.subr.mxu0 0.0
        %1373 = vmatpush1.msra.mxu0 %v1334
        %1374 = vmatprep.subr.mxu0 0.0
        %1375 = vmatpush1.msra.mxu0 %v1333
        %1376 = vmatprep.subr.mxu0 0.0
        %1377 = vmatpush1.msra.mxu0 %v1332
        %1378 = vmatprep.subr.mxu0 0.0
        %1379 = vmatpush1.msra.mxu0 %v1331
        %1380 = vmatprep.subr.mxu0 0.0
        %1381 = vmatpush1.msra.mxu0 %v1330
        %1382 = vmatprep.subr.mxu0 0.0
        %1383 = vmatpush1.msra.mxu0 %v1329
        %1384 = vmatprep.subr.mxu0 0.0
        %1385 = vmatpush2.msra.mxu0 0.0
        %1386 = vmatprep.subr.mxu0 0.0
        %1387 = vmatpush2.msra.mxu0 0.0
        %1388 = vmatprep.subr.mxu0 0.0
        %1389 = vmatpush2.msra.mxu0 0.0
        %1390 = vmatprep.subr.mxu0 0.0
        %1391 = vmatpush2.msra.mxu0 0.0
        %1392 = vmatprep.subr.mxu0 0.0
        %1393 = vmatpush2.msra.mxu0 0.0
        %1394 = vmatprep.subr.mxu0 0.0
        %1395 = vmatpush2.msra.mxu0 0.0
        %1396 = vmatprep.subr.mxu0 0.0
        %1397 = vmatpush2.msra.mxu0 0.0
        %1398 = vmatprep.subr.mxu0 0.0
        %1399 = vmatpush2.msra.mxu0 0.0
        %1400 = vmatprep.subr.mxu0 0.0
        %1401 = vmatpush2.msra.mxu0 0.0
        %1402 = vmatprep.subr.mxu0 0.0
        %1403 = vmatpush2.msra.mxu0 0.0
        %1404 = vmatprep.subr.mxu0 0.0
        %1405 = vmatpush2.msra.mxu0 0.0
        %1406 = vmatprep.subr.mxu0 0.0
        %1407 = vmatpush2.msra.mxu0 0.0
        %1408 = vmatprep.subr.mxu0 0.0
        %1409 = vmatpush2.msra.mxu0 0.0
        %1410 = vmatprep.subr.mxu0 0.0
        %1411 = vmatpush2.msra.mxu0 0.0
        %1412 = vmatprep.subr.mxu0 0.0
        %1413 = vmatpush2.msra.mxu0 0.0
        %1414 = vmatprep.subr.mxu0 0.0
        %1415 = vmatpush2.msra.mxu0 0.0
        %1416 = vmatprep.mubr.f32.mxu0 0.0
        %1417 = vmatmul.mubr.f32.gmra.mxu0 %v1313
        %v1418 = vpop.f32.mrf.mxu0
        %v1419 = vadd.f32 %v1350, %v1418
        %v1420 = vpop.f32.mrf.mxu0
        %1421 = vmatprep.mubr.f32.mxu0 0.0
        %1422 = vmatmul.mubr.f32.gmra.mxu0 %v1314
        %v1423 = vpop.f32.mrf.mxu0
        %v1424 = vadd.f32 %v1350, %v1423
        %v1425 = vpop.f32.mrf.mxu0
        %1426 = vmatprep.mubr.f32.mxu0 0.0
        %1427 = vmatmul.mubr.f32.gmra.mxu0 %v1315
        %v1428 = vpop.f32.mrf.mxu0
        %v1429 = vadd.f32 %v1350, %v1428
        %v1430 = vpop.f32.mrf.mxu0
        %1431 = vmatprep.mubr.f32.mxu0 0.0
        %1432 = vmatmul.mubr.f32.gmra.mxu0 %v1316
        %v1433 = vpop.f32.mrf.mxu0
        %v1434 = vadd.f32 %v1350, %v1433
        %v1435 = vpop.f32.mrf.mxu0
        %1436 = vmatprep.mubr.f32.mxu0 0.0
        %1437 = vmatmul.mubr.f32.gmra.mxu0 %v1317
        %v1438 = vpop.f32.mrf.mxu0
        %v1439 = vadd.f32 %v1350, %v1438
        %v1440 = vpop.f32.mrf.mxu0
        %1441 = vmatprep.mubr.f32.mxu0 0.0
        %1442 = vmatmul.mubr.f32.gmra.mxu0 %v1318
        %v1443 = vpop.f32.mrf.mxu0
        %v1444 = vadd.f32 %v1350, %v1443
        %v1445 = vpop.f32.mrf.mxu0
        %1446 = vmatprep.mubr.f32.mxu0 0.0
        %1447 = vmatmul.mubr.f32.gmra.mxu0 %v1319
        %v1448 = vpop.f32.mrf.mxu0
        %v1449 = vadd.f32 %v1350, %v1448
        %v1450 = vpop.f32.mrf.mxu0
        %1451 = vmatprep.mubr.f32.mxu0 0.0
        %1452 = vmatmul.mubr.f32.gmra.mxu0 %v1320
        %v1453 = vpop.f32.mrf.mxu0
        %v1454 = vadd.f32 %v1350, %v1453
        %v1455 = vpop.f32.mrf.mxu0
        %1456 = vmatprep.mubr.f32.mxu0 0.0
        %1457 = vmatmul.mubr.f32.gmra.mxu0 %v1321
        %v1458 = vpop.f32.mrf.mxu0
        %v1459 = vadd.f32 %v1350, %v1458
        %v1460 = vpop.f32.mrf.mxu0
        %1461 = vmatprep.mubr.f32.mxu0 0.0
        %1462 = vmatmul.mubr.f32.gmra.mxu0 %v1322
        %v1463 = vpop.f32.mrf.mxu0
        %v1464 = vadd.f32 %v1350, %v1463
        %v1465 = vpop.f32.mrf.mxu0
        %1466 = vmatprep.mubr.f32.mxu0 0.0
        %1467 = vmatmul.mubr.f32.gmra.mxu0 %v1323
        %v1468 = vpop.f32.mrf.mxu0
        %v1469 = vadd.f32 %v1350, %v1468
        %v1470 = vpop.f32.mrf.mxu0
        %1471 = vmatprep.mubr.f32.mxu0 0.0
        %1472 = vmatmul.mubr.f32.gmra.mxu0 %v1324
        %v1473 = vpop.f32.mrf.mxu0
        %v1474 = vadd.f32 %v1350, %v1473
        %v1475 = vpop.f32.mrf.mxu0
        %1476 = vmatprep.mubr.f32.mxu0 0.0
        %1477 = vmatmul.mubr.f32.gmra.mxu0 %v1325
        %v1478 = vpop.f32.mrf.mxu0
        %v1479 = vadd.f32 %v1350, %v1478
        %v1480 = vpop.f32.mrf.mxu0
        %1481 = vmatprep.mubr.f32.mxu0 0.0
        %1482 = vmatmul.mubr.f32.gmra.mxu0 %v1326
        %v1483 = vpop.f32.mrf.mxu0
        %v1484 = vadd.f32 %v1350, %v1483
        %v1485 = vpop.f32.mrf.mxu0
        %1486 = vmatprep.mubr.f32.mxu0 0.0
        %1487 = vmatmul.mubr.f32.gmra.mxu0 %v1327
        %v1488 = vpop.f32.mrf.mxu0
        %v1489 = vadd.f32 %v1350, %v1488
        %v1490 = vpop.f32.mrf.mxu0
        %1491 = vmatprep.mubr.f32.mxu0 0.0
        %1492 = vmatmul.mubr.f32.gmra.mxu0 %v1328
        %v1493 = vpop.f32.mrf.mxu0
        %v1494 = vadd.f32 %v1350, %v1493
        %v1495 = vpop.f32.mrf.mxu0
        %1496 = vdwg.mxu0
        %1497 = vst [vmem:[%s274] sm:$0xff] %v1419
        %1498 = vst [vmem:[%s274 + $0x8] sm:$0xff] %v1424
        %1499 = vst [vmem:[%s274 + $0x10] sm:$0xff] %v1429
        %1500 = vst [vmem:[%s274 + $0x18] sm:$0xff] %v1434
        %1501 = vst [vmem:[%s274 + $0x20] sm:$0xff] %v1439
        %1502 = vst [vmem:[%s274 + $0x28] sm:$0xff] %v1444
        %1503 = vst [vmem:[%s274 + $0x30] sm:$0xff] %v1449
        %1504 = vst [vmem:[%s274 + $0x38] sm:$0xff] %v1454
        %1505 = vst [vmem:[%s274 + $0x40] sm:$0xff] %v1459
        %1506 = vst [vmem:[%s274 + $0x48] sm:$0xff] %v1464
        %1507 = vst [vmem:[%s274 + $0x50] sm:$0xff] %v1469
        %1508 = vst [vmem:[%s274 + $0x58] sm:$0xff] %v1474
        %1509 = vst [vmem:[%s274 + $0x60] sm:$0xff] %v1479
        %1510 = vst [vmem:[%s274 + $0x68] sm:$0xff] %v1484
        %1511 = vst [vmem:[%s274 + $0x70] sm:$0xff] %v1489
        %1512 = vst [vmem:[%s274 + $0x78] sm:$0xff] %v1494
        %s1513 = sand.u32 %s181, 1
        %s1514 = scalar_lea.sflag [#allocation3], %s1513
        %s1515 = sand.u32 %s181, 1
        %s1516 = smul.addr %s1515, 128
        %s1517 = scalar_lea.vmem [#allocation2], %s1516
        // Predicated region
        $region49: #{tpu_custom_call.1} parent=47 // pred_check
          %p1518 = pneg %p191
        $region50: #{tpu_custom_call.1} parent=47 // pred_check_branch
          %1520 = sbr.rel (%p1518) target = $region52
        $region51: #{tpu_custom_call.1} parent=47 // pred_region
          %s1521 = smul.u32 16, %s21
          %s1523 = ssub.s32 2048, 2048
          %1524 = vsyncadd %s1514, %s1523
          %s1525 = smul.addr %s1521, 128
          %s1526 = scalar_lea.hbm %s7, %s1525
          %s1527 = sshll.u32 %s1517, 4
          %s1528 = int_to_ptr.vmem [resolvable:$true] %s1527
          %1533 = dma.vmem_to_hbm [thread:$0]  %s1528, 2048, %s1526, %s1514, 128, 128, 8
        $region52: #{tpu_custom_call.1} parent=47 // pred_fallthru
          _
      $region48: #{tpu_custom_call.1} parent=5 // pred_fallthru
        _
      %p1534 = scmp.le.s32.totalorder 2, %s16
      // Predicated region
      $region53: #{tpu_custom_call.1} parent=5 // pred_check
        %p1535 = pneg %p1534
      $region54: #{tpu_custom_call.1} parent=5 // pred_check_branch
        %1537 = sbr.rel (%p1535) target = $region56
      $region55: #{tpu_custom_call.1} parent=5 // pred_region
        %s1538 = ssub.s32 %s16, 2
        // Predicated region
        $region57: #{tpu_custom_call.1} parent=55 // pred_check
          %p1539 = pneg %p197
        $region58: #{tpu_custom_call.1} parent=55 // pred_check_branch
          %1541 = sbr.rel (%p1539) target = $region60
        $region59: #{tpu_custom_call.1} parent=55 // pred_region
          %s1542 = sand.u32 %s182, 1
          %s1543 = scalar_lea.sflag [#allocation3], %s1542
          %s1544 = sand.u32 %s182, 1
          %s1545 = smul.addr %s1544, 128
          %s1546 = scalar_lea.vmem [#allocation2], %s1545
          %1547 = dma.done %s1543, 2048
        $region60: #{tpu_custom_call.1} parent=55 // pred_fallthru
          _
      $region56: #{tpu_custom_call.1} parent=5 // pred_fallthru
        _
    $region6: #{tpu_custom_call.1} parent=1 // loop_footer
      %s20 = sadd.s32 1, %s16
    $region7: #{tpu_custom_call.1} parent=1 // loop_footer_branch
      %15 = sbr.rel target = $region3
    $region8: #{tpu_custom_call.1} parent=1 // loop_exit
      _
    %1548 = vsyncpa [#allocation3], 1
    %s1549 = scalar_lea.sflag [#allocation3], 1
    %1550 = vsyncpa %s1549, 1

</llo_original>
